<compile_context>
chip_gen: v7x
topology: tpu7x:2x2x1
jax: 0.10.0
libtpu: 0.0.40
codegen_flags: <defaults>
</compile_context>

<pallas_src>
import functools

import jax
import jax.numpy as jnp
import numpy as np
from jax import lax
from jax.experimental import pallas as pl
from jax.experimental.pallas import tpu as pltpu


def _round_up(x, m):
    return ((x + m - 1) // m) * m


# ----------------------------------------------------------------------------
# Glue (plain JAX): FPS sampling + ball query (data-dependent index generation)
# ----------------------------------------------------------------------------
def farthest_point_sample(xyz, npoint):
    """xyz: (B, N, 3) f32 -> (B, npoint) int32 (same semantics as CUDA FPS, starts at idx 0)."""
    B, N, _ = xyz.shape

    def body(i, state):
        dists, farthest, inds = state
        inds = inds.at[:, i].set(farthest)
        centroid = jnp.take_along_axis(xyz, farthest[:, None, None], axis=1)  # (B,1,3)
        d = jnp.sum((xyz - centroid) ** 2, axis=-1)                           # (B,N)
        dists = jnp.minimum(dists, d)
        farthest = jnp.argmax(dists, axis=-1).astype(jnp.int32)
        return dists, farthest, inds

    dists = jnp.full((B, N), 1e10, jnp.float32)
    farthest = jnp.zeros((B,), jnp.int32)
    inds = jnp.zeros((B, npoint), jnp.int32)
    _, _, inds = lax.fori_loop(0, npoint, body, (dists, farthest, inds))
    # TODO(synk): FPS stays a serial JAX fori_loop; a VMEM-resident Pallas FPS would help for large N.
    return inds


def ball_query(xyz, new_xyz, radius, nsample):
    """CUDA ball_query semantics: up to nsample in-radius neighbours in original point order;
    missing slots repeat the first found index (point 0 when the ball is empty)."""
    B, N, _ = xyz.shape
    diff = new_xyz[:, :, None, :] - xyz[:, None, :, :]             # (B,S,N,3)
    dist2 = jnp.sum(diff * diff, axis=-1)                          # (B,S,N)
    mask = dist2 < (radius * radius)
    # top_k of negated index picks the nsample smallest in-radius point indices (no full argsort).
    neg = jnp.where(mask, -jnp.arange(N, dtype=jnp.int32)[None, None, :], jnp.int32(-N))
    vals, _ = lax.top_k(neg, nsample)
    sorted_idx = (-vals).astype(jnp.int32)                         # ascending; == N where invalid
    cnt = jnp.sum(mask, axis=-1)                                   # (B,S)
    first = jnp.where(cnt[..., None] > 0, sorted_idx[..., :1], 0)
    k = jnp.arange(nsample, dtype=jnp.int32)[None, None, :]
    idx = jnp.where(k < cnt[..., None], sorted_idx, first)
    return jnp.minimum(idx, N - 1)


# ----------------------------------------------------------------------------
# Tile / chunk selection (generation-aware VMEM budget, sized for v7x 64 MiB/TC)
# ----------------------------------------------------------------------------
def _pick_tile_points(npoint, nsample, c_feat_pad, c_last, c_mid_max,
                      vmem_budget_bytes=20 << 20):
    tp_cap = _round_up(npoint, 128)
    for cand in (1024, 896, 768, 640, 512, 384, 256, 128):
        if cand > tp_cap:
            continue
        in_b = 2 * (16 + max(c_feat_pad, 16)) * nsample * cand * 2   # dbl-buffered bf16 inputs
        out_b = 2 * c_last * cand * 4                                 # dbl-buffered f32 output
        act_b = min(c_mid_max * nsample * cand * 4, 8 << 20)          # bounded by chunked online max
        if in_b + out_b + act_b <= vmem_budget_bytes:
            return cand
    return 128


def _chunk_bounds(nsample, tile_points, c_mid_max, act_budget_bytes=6 << 20):
    """Online-max chunks over the nsample axis so the widest activation stays bounded."""
    per_sample = c_mid_max * tile_points * 4
    cs = int(max(1, min(nsample, act_budget_bytes // per_sample)))
    bounds, s = [], 0
    while s < nsample:
        bounds.append((s, min(nsample, s + cs)))
        s += cs
    return tuple(bounds)


# ----------------------------------------------------------------------------
# Grouping into the kernel layout:
#   gx: (B, n_tiles, 8,      nsample*tile_points)   bf16   (xyz, zero-padded to 8 channels)
#   gf: (B, n_tiles, C_pad,  nsample*tile_points)   bf16
# lanes within a tile are s-major: lane = s*tile_points + p_local  ->  max-pool slices are
# contiguous, 128-aligned lane blocks.
# ----------------------------------------------------------------------------
def _group_for_kernel(xyz, features, new_xyz, idx, radius, normalize_xyz, tile_points):
    B, N, _ = xyz.shape
    C = features.shape[1]
    S, ns = idx.shape[1], idx.shape[2]
    tp = tile_points
    n_tiles = pl.cdiv(S, tp)
    S_pad = n_tiles * tp
    if S_pad != S:
        idx = jnp.pad(idx, ((0, 0), (0, S_pad - S), (0, 0)))
        new_xyz = jnp.pad(new_xyz, ((0, 0), (0, S_pad - S), (0, 0)))

    # s-major-within-tile gather order.
    idx_r = idx.reshape(B, n_tiles, tp, ns).transpose(0, 1, 3, 2).reshape(B, 1, n_tiles * ns * tp)
    M = n_tiles * ns * tp

    xyz_t = jnp.transpose(xyz, (0, 2, 1))                                       # (B,3,N)
    gx = jnp.take_along_axis(xyz_t, jnp.broadcast_to(idx_r, (B, 3, M)), axis=2)
    gx = gx.reshape(B, 3, n_tiles, ns, tp)
    centers = jnp.transpose(new_xyz, (0, 2, 1)).reshape(B, 3, n_tiles, 1, tp)
    gx = gx - centers
    if normalize_xyz:
        gx = gx / radius

    gf = jnp.take_along_axis(features, jnp.broadcast_to(idx_r, (B, C, M)), axis=2)
    gf = gf.reshape(B, C, n_tiles, ns, tp)

    cx_pad = 8
    cf_pad = _round_up(C, 8)
    gx = jnp.transpose(gx, (0, 2, 1, 3, 4))                                     # (B,nt,3,ns,tp)
    gf = jnp.transpose(gf, (0, 2, 1, 3, 4))                                     # (B,nt,C,ns,tp)
    gx = jnp.pad(gx, ((0, 0), (0, 0), (0, cx_pad - 3), (0, 0), (0, 0)))
    if cf_pad != C:
        gf = jnp.pad(gf, ((0, 0), (0, 0), (0, cf_pad - C), (0, 0), (0, 0)))
    gx = gx.reshape(B, n_tiles, cx_pad, ns * tp).astype(jnp.bfloat16)
    gf = gf.reshape(B, n_tiles, cf_pad, ns * tp).astype(jnp.bfloat16)
    return gx, gf, S_pad


def _kernel_weights(params, use_xyz, c_feat):
    """params: [(W (cout,cin) f32, b (cout,) f32)] with conv+BN folded.  Layer-0 weight is split
    into an xyz part and a feature part (both zero-padded to 8-multiples) so no concat is needed."""
    w0, b0 = params[0]
    c1 = w0.shape[0]
    if use_xyz:
        w0x, w0f = w0[:, :3], w0[:, 3:]
    else:
        w0x, w0f = jnp.zeros((c1, 3), w0.dtype), w0
    w0x = jnp.pad(w0x, ((0, 0), (0, 8 - 3)))
    cf_pad = _round_up(c_feat, 8)
    w0f = jnp.pad(w0f, ((0, 0), (0, cf_pad - w0f.shape[1])))
    flat = [w0x.astype(jnp.bfloat16), w0f.astype(jnp.bfloat16),
            b0.reshape(-1, 1).astype(jnp.float32)]
    for w, b in params[1:]:
        flat.append(w.astype(jnp.bfloat16))
        flat.append(b.reshape(-1, 1).astype(jnp.float32))
    return flat


# ----------------------------------------------------------------------------
# Pallas kernel: channels-first SharedMLP + online max-pool over nsample
# ----------------------------------------------------------------------------
def _make_kernel(n_layers, chunk_bounds, tile_points):
    tp = tile_points

    def kernel(gx_ref, gf_ref, *rest):
        out_ref = rest[-1]
        wb = rest[:-1]
        w0x = wb[0][...]
        w0f = wb[1][...]
        b0 = wb[2][...]
        acc = None
        for (s0, s1) in chunk_bounds:                       # static online-max chunks over nsample
            lo, hi = s0 * tp, s1 * tp
            x3 = gx_ref[0, 0, :, lo:hi]                     # (8,   cs*tp) bf16
            xc = gf_ref[0, 0, :, lo:hi]                     # (Cp,  cs*tp) bf16
            h = jnp.dot(w0x, x3, preferred_element_type=jnp.float32)
            h = h + jnp.dot(w0f, xc, preferred_element_type=jnp.float32)
            h = jnp.maximum(h + b0, 0.0)                    # f32 bias + ReLU
            for l in range(1, n_layers):
                w = wb[1 + 2 * l][...]
                b = wb[2 + 2 * l][...]
                h = jnp.dot(w, h.astype(w.dtype), preferred_element_type=jnp.float32)
                h = jnp.maximum(h + b, 0.0)
            # max-pool over the samples of this chunk: contiguous, 128-aligned lane slices.
            m = h[:, 0:tp]
            for s in range(1, s1 - s0):
                m = jnp.maximum(m, h[:, s * tp:(s + 1) * tp])
            acc = m if acc is None else jnp.maximum(acc, m)
        out_ref[0] = acc                                    # (c_last, tp) lane-dense store

    return kernel


def shared_mlp_maxpool(gx, gf, flat_wb, *, n_layers, tile_points, c_last, chunk_bounds):
    B, n_tiles, cx, nsp = gx.shape
    cf = gf.shape[2]
    tp = tile_points
    kernel = _make_kernel(n_layers, chunk_bounds, tp)

    in_specs = [
        pl.BlockSpec((1, 1, cx, nsp), lambda b, t: (b, t, 0, 0)),
        pl.BlockSpec((1, 1, cf, nsp), lambda b, t: (b, t, 0, 0)),
    ]
    for arr in flat_wb:
        in_specs.append(pl.BlockSpec(arr.shape, lambda b, t: (0, 0)))

    return pl.pallas_call(
        kernel,
        out_shape=jax.ShapeDtypeStruct((B, c_last, n_tiles * tp), jnp.float32),
        grid=(B, n_tiles),
        in_specs=in_specs,
        out_specs=pl.BlockSpec((1, c_last, tp), lambda b, t: (b, 0, t)),
        compiler_params=pltpu.CompilerParams(
            dimension_semantics=("parallel", "parallel"),
            vmem_limit_bytes=48 * 1024 * 1024),
    )(gx, gf, *flat_wb)


# ----------------------------------------------------------------------------
# Parameter init: Conv2d(1x1) + eval-mode BatchNorm folded -> (W (cout,cin), b (cout,))
# ----------------------------------------------------------------------------
def init_params(key, mlp_spec, use_xyz=True, eps=1e-5):
    spec = list(mlp_spec)
    if use_xyz and len(spec) > 0:
        spec = [spec[0] + 3] + spec[1:]
    params = []
    for i in range(len(spec) - 1):
        cin, cout = spec[i], spec[i + 1]
        key, k1, k2, k3, k4, k5, k6 = jax.random.split(key, 7)
        w = jax.random.normal(k1, (cout, cin), jnp.float32) / jnp.sqrt(cin)
        conv_b = 0.1 * jax.random.normal(k2, (cout,), jnp.float32)
        gamma = 1.0 + 0.1 * jax.random.normal(k3, (cout,), jnp.float32)
        beta = 0.1 * jax.random.normal(k4, (cout,), jnp.float32)
        rmean = 0.1 * jax.random.normal(k5, (cout,), jnp.float32)
        rvar = 1.0 + 0.1 * jax.random.uniform(k6, (cout,), jnp.float32)
        scale = gamma / jnp.sqrt(rvar + eps)
        w_eff = w * scale[:, None]                       # (cout, cin)
        b_eff = (conv_b - rmean) * scale + beta          # (cout,)
        params.append((w_eff, b_eff))
    return params


# ----------------------------------------------------------------------------
# Full forward (PointnetSAModuleVotes.forward, sample_method='fps')
# ----------------------------------------------------------------------------
def pointnet_sa_module_votes(xyz, features, params, inds=None, *, npoint, radius, nsample,
                             use_xyz=True, normalize_xyz=False):
    B = xyz.shape[0]
    C = features.shape[1]
    c_last = params[-1][0].shape[0]
    c_mid_max = max(w.shape[0] for w, _ in params)

    if inds is None:
        inds = farthest_point_sample(xyz, npoint)                       # (B, npoint) int32
    new_xyz = xyz[jnp.arange(B)[:, None], inds]                         # (B, npoint, 3)
    idx = ball_query(xyz, new_xyz, radius, nsample)                     # (B, npoint, nsample)

    tp = _pick_tile_points(npoint, nsample, _round_up(C, 8), c_last, c_mid_max)
    gx, gf, s_pad = _group_for_kernel(xyz, features, new_xyz, idx, radius, normalize_xyz, tp)
    chunks = _chunk_bounds(nsample, tp, c_mid_max)
    flat_wb = _kernel_weights(params, use_xyz, C)

    new_features = shared_mlp_maxpool(gx, gf, flat_wb, n_layers=len(params),
                                      tile_points=tp, c_last=c_last, chunk_bounds=chunks)
    if s_pad != npoint:
        new_features = new_features[:, :, :npoint]                      # drop tail padding
    # TODO(synk): PyTorch returns inds as int64; with JAX x64 disabled we return int32.
    return new_xyz, new_features, inds


# ----------------------------------------------------------------------------
# Pure-JAX reference (mirrors the kernel's bf16 quantization of inputs/weights/activations)
# ----------------------------------------------------------------------------
def _reference(xyz, features, params, inds, radius, nsample, use_xyz, normalize_xyz):
    B = xyz.shape[0]
    new_xyz = xyz[jnp.arange(B)[:, None], inds]
    idx = ball_query(xyz, new_xyz, radius, nsample)
    bidx = jnp.arange(B)[:, None, None]
    gxyz = xyz[bidx, idx] - new_xyz[:, :, None, :]
    if normalize_xyz:
        gxyz = gxyz / radius
    gfeat = jnp.transpose(features, (0, 2, 1))[bidx, idx]
    grouped = jnp.concatenate([gxyz, gfeat], axis=-1) if use_xyz else gfeat
    x = grouped
    for w, b in params:
        xq = x.astype(jnp.bfloat16).astype(jnp.float32)
        wq = w.astype(jnp.bfloat16).astype(jnp.float32)
        x = jnp.maximum(jnp.einsum('bsnc,dc->bsnd', xq, wq) + b, 0.0)
    pooled = jnp.max(x, axis=2)                                         # (B, S, c_last)
    return new_xyz, jnp.transpose(pooled, (0, 2, 1)), inds


if __name__ == "__main__":
    key = jax.random.PRNGKey(0)
    B, N, C = 2, 128, 4
    npoint, nsample, radius = 64, 16, 0.4
    mlp = [C, 32, 64]

    k1, k2, k3 = jax.random.split(key, 3)
    xyz = jax.random.uniform(k1, (B, N, 3), dtype=jnp.float32)
    features = jax.random.normal(k2, (B, C, N), dtype=jnp.float32)
    params = init_params(k3, mlp, use_xyz=True)

    # Sample once (module also accepts precomputed inds, like the PyTorch version).
    inds0 = farthest_point_sample(xyz, npoint)

    fwd = jax.jit(functools.partial(pointnet_sa_module_votes,
                                    npoint=npoint, radius=radius, nsample=nsample,
                                    use_xyz=True, normalize_xyz=False))
    new_xyz, new_features, inds = fwd(xyz, features, params, inds0)
    jax.block_until_ready((new_xyz, new_features, inds))

    # Correctness check vs. pure-JAX reference.
    ref_xyz, ref_features, ref_inds = _reference(xyz, features, params, inds0,
                                                 radius, nsample, True, False)
    np.testing.assert_array_equal(np.asarray(inds), np.asarray(ref_inds))
    np.testing.assert_allclose(np.asarray(new_xyz), np.asarray(ref_xyz), rtol=1e-6, atol=1e-6)
    np.testing.assert_allclose(np.asarray(new_features), np.asarray(ref_features),
                               rtol=2e-2, atol=2e-2)

    assert new_xyz.shape == (B, npoint, 3)
    assert new_features.shape == (B, mlp[-1], npoint)
    assert inds.shape == (B, npoint)
    print("KERNEL_OK")
</pallas_src>

<mosaic_0001>
module attributes {stable_mosaic.version = 11 : i64} {
  func.func @kernel(%arg0: i32, %arg1: i32, %arg2: memref<1x1x8x2048xbf16, #tpu.memory_space<vmem>>, %arg3: memref<1x1x8x2048xbf16, #tpu.memory_space<vmem>>, %arg4: memref<32x8xbf16, #tpu.memory_space<vmem>>, %arg5: memref<32x8xbf16, #tpu.memory_space<vmem>>, %arg6: memref<32x1xf32, #tpu.memory_space<vmem>>, %arg7: memref<64x32xbf16, #tpu.memory_space<vmem>>, %arg8: memref<64x1xf32, #tpu.memory_space<vmem>>, %arg9: memref<1x64x128xf32, #tpu.memory_space<vmem>>) attributes {dimension_semantics = [#tpu.dimension_semantics<parallel>, #tpu.dimension_semantics<parallel>], iteration_bounds = array<i64: 2, 1>, scalar_prefetch = 0 : i64, scratch_operands = 0 : i64, tpu.core_type = #tpu.core_type<tc>, window_params = [{transform_indices = @transform_0, window_bounds = array<i64: 1, 1, 8, 2048>}, {transform_indices = @transform_1, window_bounds = array<i64: 1, 1, 8, 2048>}, {pipeline_mode = #tpu.pipeline_mode<synchronous>, transform_indices = @transform_2, window_bounds = array<i64: 32, 8>}, {pipeline_mode = #tpu.pipeline_mode<synchronous>, transform_indices = @transform_3, window_bounds = array<i64: 32, 8>}, {pipeline_mode = #tpu.pipeline_mode<synchronous>, transform_indices = @transform_4, window_bounds = array<i64: 32, 1>}, {pipeline_mode = #tpu.pipeline_mode<synchronous>, transform_indices = @transform_5, window_bounds = array<i64: 64, 32>}, {pipeline_mode = #tpu.pipeline_mode<synchronous>, transform_indices = @transform_6, window_bounds = array<i64: 64, 1>}, {transform_indices = @transform_7, window_bounds = array<i64: 1, 64, 128>}]} {
    %c0 = arith.constant 0 : index
    %c0_0 = arith.constant 0 : index
    %0 = vector.load %arg4[%c0, %c0_0] : memref<32x8xbf16, #tpu.memory_space<vmem>>, vector<32x8xbf16>
    %c0_1 = arith.constant 0 : index
    %c0_2 = arith.constant 0 : index
    %1 = vector.load %arg5[%c0_1, %c0_2] : memref<32x8xbf16, #tpu.memory_space<vmem>>, vector<32x8xbf16>
    %c0_3 = arith.constant 0 : index
    %c0_4 = arith.constant 0 : index
    %2 = vector.load %arg6[%c0_3, %c0_4] : memref<32x1xf32, #tpu.memory_space<vmem>>, vector<32x1xf32>
    %c0_5 = arith.constant 0 : index
    %c0_6 = arith.constant 0 : index
    %c0_7 = arith.constant 0 : index
    %c0_8 = arith.constant 0 : index
    %3 = vector.load %arg2[%c0_5, %c0_6, %c0_7, %c0_8] : memref<1x1x8x2048xbf16, #tpu.memory_space<vmem>>, vector<1x1x8x2048xbf16>
    %4 = vector.shape_cast %3 : vector<1x1x8x2048xbf16> to vector<8x2048xbf16>
    %c0_9 = arith.constant 0 : index
    %c0_10 = arith.constant 0 : index
    %c0_11 = arith.constant 0 : index
    %c0_12 = arith.constant 0 : index
    %5 = vector.load %arg3[%c0_9, %c0_10, %c0_11, %c0_12] : memref<1x1x8x2048xbf16, #tpu.memory_space<vmem>>, vector<1x1x8x2048xbf16>
    %6 = vector.shape_cast %5 : vector<1x1x8x2048xbf16> to vector<8x2048xbf16>
    %cst = arith.constant dense<0.000000e+00> : vector<32x2048xf32>
    %7 = tpu.matmul %0, %4, %cst {dimension_numbers = #tpu.dot_dimension_numbers<[1], [0], [0], [1], [0, 0, 1, 1], [], []>} : vector<32x8xbf16>, vector<8x2048xbf16>, vector<32x2048xf32> -> vector<32x2048xf32>
    %cst_13 = arith.constant dense<0.000000e+00> : vector<32x2048xf32>
    %8 = tpu.matmul %1, %6, %cst_13 {dimension_numbers = #tpu.dot_dimension_numbers<[1], [0], [0], [1], [0, 0, 1, 1], [], []>} : vector<32x8xbf16>, vector<8x2048xbf16>, vector<32x2048xf32> -> vector<32x2048xf32>
    %9 = arith.addf %7, %8 : vector<32x2048xf32>
    %10 = vector.broadcast %2 : vector<32x1xf32> to vector<32x2048xf32>
    %11 = arith.addf %9, %10 : vector<32x2048xf32>
    %cst_14 = arith.constant 0.000000e+00 : f32
    %12 = vector.broadcast %cst_14 : f32 to vector<32x2048xf32>
    %13 = arith.maximumf %11, %12 : vector<32x2048xf32>
    %c0_15 = arith.constant 0 : index
    %c0_16 = arith.constant 0 : index
    %14 = vector.load %arg7[%c0_15, %c0_16] : memref<64x32xbf16, #tpu.memory_space<vmem>>, vector<64x32xbf16>
    %c0_17 = arith.constant 0 : index
    %c0_18 = arith.constant 0 : index
    %15 = vector.load %arg8[%c0_17, %c0_18] : memref<64x1xf32, #tpu.memory_space<vmem>>, vector<64x1xf32>
    %16 = arith.truncf %13 : vector<32x2048xf32> to vector<32x2048xbf16>
    %cst_19 = arith.constant dense<0.000000e+00> : vector<64x2048xf32>
    %17 = tpu.matmul %14, %16, %cst_19 {dimension_numbers = #tpu.dot_dimension_numbers<[1], [0], [0], [1], [0, 0, 1, 1], [], []>} : vector<64x32xbf16>, vector<32x2048xbf16>, vector<64x2048xf32> -> vector<64x2048xf32>
    %18 = vector.broadcast %15 : vector<64x1xf32> to vector<64x2048xf32>
    %19 = arith.addf %17, %18 : vector<64x2048xf32>
    %cst_20 = arith.constant 0.000000e+00 : f32
    %20 = vector.broadcast %cst_20 : f32 to vector<64x2048xf32>
    %21 = arith.maximumf %19, %20 : vector<64x2048xf32>
    %22 = vector.extract_strided_slice %21 {offsets = [0, 0], sizes = [64, 128], strides = [1, 1]} : vector<64x2048xf32> to vector<64x128xf32>
    %23 = vector.extract_strided_slice %21 {offsets = [0, 128], sizes = [64, 128], strides = [1, 1]} : vector<64x2048xf32> to vector<64x128xf32>
    %24 = arith.maximumf %22, %23 : vector<64x128xf32>
    %25 = vector.extract_strided_slice %21 {offsets = [0, 256], sizes = [64, 128], strides = [1, 1]} : vector<64x2048xf32> to vector<64x128xf32>
    %26 = arith.maximumf %24, %25 : vector<64x128xf32>
    %27 = vector.extract_strided_slice %21 {offsets = [0, 384], sizes = [64, 128], strides = [1, 1]} : vector<64x2048xf32> to vector<64x128xf32>
    %28 = arith.maximumf %26, %27 : vector<64x128xf32>
    %29 = vector.extract_strided_slice %21 {offsets = [0, 512], sizes = [64, 128], strides = [1, 1]} : vector<64x2048xf32> to vector<64x128xf32>
    %30 = arith.maximumf %28, %29 : vector<64x128xf32>
    %31 = vector.extract_strided_slice %21 {offsets = [0, 640], sizes = [64, 128], strides = [1, 1]} : vector<64x2048xf32> to vector<64x128xf32>
    %32 = arith.maximumf %30, %31 : vector<64x128xf32>
    %33 = vector.extract_strided_slice %21 {offsets = [0, 768], sizes = [64, 128], strides = [1, 1]} : vector<64x2048xf32> to vector<64x128xf32>
    %34 = arith.maximumf %32, %33 : vector<64x128xf32>
    %35 = vector.extract_strided_slice %21 {offsets = [0, 896], sizes = [64, 128], strides = [1, 1]} : vector<64x2048xf32> to vector<64x128xf32>
    %36 = arith.maximumf %34, %35 : vector<64x128xf32>
    %37 = vector.extract_strided_slice %21 {offsets = [0, 1024], sizes = [64, 128], strides = [1, 1]} : vector<64x2048xf32> to vector<64x128xf32>
    %38 = arith.maximumf %36, %37 : vector<64x128xf32>
    %39 = vector.extract_strided_slice %21 {offsets = [0, 1152], sizes = [64, 128], strides = [1, 1]} : vector<64x2048xf32> to vector<64x128xf32>
    %40 = arith.maximumf %38, %39 : vector<64x128xf32>
    %41 = vector.extract_strided_slice %21 {offsets = [0, 1280], sizes = [64, 128], strides = [1, 1]} : vector<64x2048xf32> to vector<64x128xf32>
    %42 = arith.maximumf %40, %41 : vector<64x128xf32>
    %43 = vector.extract_strided_slice %21 {offsets = [0, 1408], sizes = [64, 128], strides = [1, 1]} : vector<64x2048xf32> to vector<64x128xf32>
    %44 = arith.maximumf %42, %43 : vector<64x128xf32>
    %45 = vector.extract_strided_slice %21 {offsets = [0, 1536], sizes = [64, 128], strides = [1, 1]} : vector<64x2048xf32> to vector<64x128xf32>
    %46 = arith.maximumf %44, %45 : vector<64x128xf32>
    %47 = vector.extract_strided_slice %21 {offsets = [0, 1664], sizes = [64, 128], strides = [1, 1]} : vector<64x2048xf32> to vector<64x128xf32>
    %48 = arith.maximumf %46, %47 : vector<64x128xf32>
    %49 = vector.extract_strided_slice %21 {offsets = [0, 1792], sizes = [64, 128], strides = [1, 1]} : vector<64x2048xf32> to vector<64x128xf32>
    %50 = arith.maximumf %48, %49 : vector<64x128xf32>
    %51 = vector.extract_strided_slice %21 {offsets = [0, 1920], sizes = [64, 128], strides = [1, 1]} : vector<64x2048xf32> to vector<64x128xf32>
    %52 = arith.maximumf %50, %51 : vector<64x128xf32>
    %c0_21 = arith.constant 0 : index
    %c0_22 = arith.constant 0 : index
    %c0_23 = arith.constant 0 : index
    %53 = vector.load %arg9[%c0_21, %c0_22, %c0_23] : memref<1x64x128xf32, #tpu.memory_space<vmem>>, vector<1x64x128xf32>
    %54 = vector.shape_cast %53 : vector<1x64x128xf32> to vector<64x128xf32>
    %55 = vector.shape_cast %52 : vector<64x128xf32> to vector<1x64x128xf32>
    tpu.vector_store %arg9[%c0_21, %c0_22, %c0_23], %55 {strides = array<i32>} : memref<1x64x128xf32, #tpu.memory_space<vmem>>, vector<1x64x128xf32>,
    return
  }
  func.func @transform_0(%arg0: i32, %arg1: i32) -> (i32, i32, i32, i32) {
    %c0_i32 = arith.constant 0 : i32
    %c0_i32_0 = arith.constant 0 : i32
    %c0_i32_1 = arith.constant 0 : i32
    return %arg0, %arg1, %c0_i32, %c0_i32_0 : i32, i32, i32, i32
  }
  func.func @transform_1(%arg0: i32, %arg1: i32) -> (i32, i32, i32, i32) {
    %c0_i32 = arith.constant 0 : i32
    %c0_i32_0 = arith.constant 0 : i32
    %c0_i32_1 = arith.constant 0 : i32
    return %arg0, %arg1, %c0_i32, %c0_i32_0 : i32, i32, i32, i32
  }
  func.func @transform_2(%arg0: i32, %arg1: i32) -> (i32, i32) {
    %c0_i32 = arith.constant 0 : i32
    %c0_i32_0 = arith.constant 0 : i32
    %c0_i32_1 = arith.constant 0 : i32
    return %c0_i32, %c0_i32_0 : i32, i32
  }
  func.func @transform_3(%arg0: i32, %arg1: i32) -> (i32, i32) {
    %c0_i32 = arith.constant 0 : i32
    %c0_i32_0 = arith.constant 0 : i32
    %c0_i32_1 = arith.constant 0 : i32
    return %c0_i32, %c0_i32_0 : i32, i32
  }
  func.func @transform_4(%arg0: i32, %arg1: i32) -> (i32, i32) {
    %c0_i32 = arith.constant 0 : i32
    %c0_i32_0 = arith.constant 0 : i32
    %c0_i32_1 = arith.constant 0 : i32
    return %c0_i32, %c0_i32_0 : i32, i32
  }
  func.func @transform_5(%arg0: i32, %arg1: i32) -> (i32, i32) {
    %c0_i32 = arith.constant 0 : i32
    %c0_i32_0 = arith.constant 0 : i32
    %c0_i32_1 = arith.constant 0 : i32
    return %c0_i32, %c0_i32_0 : i32, i32
  }
  func.func @transform_6(%arg0: i32, %arg1: i32) -> (i32, i32) {
    %c0_i32 = arith.constant 0 : i32
    %c0_i32_0 = arith.constant 0 : i32
    %c0_i32_1 = arith.constant 0 : i32
    return %c0_i32, %c0_i32_0 : i32, i32
  }
  func.func @transform_7(%arg0: i32, %arg1: i32) -> (i32, i32, i32) {
    %c0_i32 = arith.constant 0 : i32
    %c0_i32_0 = arith.constant 0 : i32
    return %arg0, %c0_i32, %arg1 : i32, i32, i32
  }
}

</mosaic_0001>

<llo_original>
// kernel: pointnet_sa_module_votes.1
$region0: #{pointnet_sa_module_votes.1}
  #allocation0 [shape = 'u32[]', space=smem, size = 0x4, offset = 0x4, fixed_abs, tag = 'smem constant byte address 0x4 - core index']
  #allocation1 [shape = 'u32[144,128]{1,0:T(1,128)}', space=vmem, size = 0x12000, scoped, tag = 'internal scratch']
  %s0 = inlined_call_operand.vmem [shape: bf16[2,1,8,2048], index: 0, kind: input, shape index: {}]
  %s1 = inlined_call_operand.vmem [shape: bf16[2,1,8,2048], index: 1, kind: input, shape index: {}]
  %s2 = inlined_call_operand.vmem [shape: bf16[32,8], index: 2, kind: input, shape index: {}]
  %s3 = inlined_call_operand.vmem [shape: bf16[32,8], index: 3, kind: input, shape index: {}]
  %s4 = inlined_call_operand.vmem [shape: f32[32,1], index: 4, kind: input, shape index: {}]
  %s5 = inlined_call_operand.vmem [shape: bf16[64,32], index: 5, kind: input, shape index: {}]
  %s6 = inlined_call_operand.vmem [shape: f32[64,1], index: 6, kind: input, shape index: {}]
  %s7 = inlined_call_operand.hbm [shape: f32[2,64,128], index: 7, kind: output, shape index: {}]
  %s8 = sld [smem:[#allocation0]]
  $region61: #{pointnet_sa_module_votes.1} parent=0
    _
  %s10 = ssub.s32 1, %s8
  %s11 = scalar_select 0, %s10, %s8
  $region1: #{pointnet_sa_module_votes.1} parent=0
    #allocation2 [shape = 'u8[65536]{0}', space=vmem, size = 0x10000, scoped, tag = 'output window, operand 0']
    #allocation3 [shape = 's32[2]{0}', space=sflag, size = 0x8, scoped, tag = 'scoped memory for pointnet_sa_module_votes.1']
    %12 = vsyncpa [#allocation3], 0
    %s13 = scalar_lea.sflag [#allocation3], 1
    %14 = vsyncpa %s13, 0
    loop: start=0, step=1, limit=4
    $region2: #{pointnet_sa_module_votes.1} parent=1 // loop_pre_header
      _
    $region3: #{pointnet_sa_module_votes.1} parent=1 // loop_header
      %s16 = sphi 0, %s20
      %p17 = scmp.ge.s32.totalorder %s16, 4
      %s23 = sphi 0, %s35
      %s24 = sphi 0, %s31
      %s25 = sphi 0, %s23
      %s26 = sphi 0, %s24
      %s27 = sphi 0, %s25
      %s28 = sphi 0, %s26
      %s40 = sphi 0, %s42
      %s43 = sphi 0, %s40
      %s44 = sphi 0, %s43
      %s60 = sphi 0, %s44
      %s68 = sphi 0, %s70
      %s71 = sphi 0, %s68
      %s72 = sphi 0, %s71
      %s88 = sphi 0, %s72
      %s92 = sphi 0, %s92
      %s94 = sphi 0, %s92
      %s95 = sphi 0, %s94
      %s109 = sphi 0, %s95
      %s113 = sphi 0, %s113
      %s115 = sphi 0, %s113
      %s116 = sphi 0, %s115
      %s130 = sphi 0, %s116
      %s134 = sphi 0, %s134
      %s136 = sphi 0, %s134
      %s137 = sphi 0, %s136
      %s151 = sphi 0, %s137
      %s155 = sphi 0, %s155
      %s157 = sphi 0, %s155
      %s158 = sphi 0, %s157
      %s172 = sphi 0, %s158
      %s176 = sphi 0, %s176
      %s178 = sphi 0, %s176
      %s179 = sphi 0, %s178
      %s193 = sphi 0, %s179
      %s201 = sphi 0, %s203
      %s204 = sphi 0, %s201
      %s205 = sphi 0, %s204
      %s221 = sphi 0, %s205
    $region4: #{pointnet_sa_module_votes.1} parent=1 // loop_header_branch
      %19 = sbr.rel (%p17) target = $region8
    $region5: #{pointnet_sa_module_votes.1} parent=1 // loop_body
      %s21 = ssub.s32 %s16, 1
      %s22 = ssub.s32 %s16, 2
      %s29 = sadd.s32 1, %s24
      %p30 = scmp.ge.s32.totalorder %s29, 1
      %s31 = scalar_select %p30, 0, %s29
      %s32 = sadd.s32 1, %s23
      %s33 = scalar_select %p30, %s32, %s23
      %p34 = scmp.ge.s32.totalorder %s33, 2
      %s35 = scalar_select %p34, 0, %s33
      %s36 = ssub.s32 %s23, %s35
      %s37 = ssub.s32 %s24, %s31
      %s38 = sor.u32 %s36, %s37
      %p39 = scmp.eq.s32.totalorder %s38, 0
      %s41 = sadd.s32 %s40, 1
      %s42 = scalar_select %p39, %s40, %s41
      %p45 = pneg %p39
      %p46 = scmp.eq.s32.totalorder %s16, 1
      %p47 = por %p45, %p46
      %p48 = scmp.ne.s32.totalorder %s40, %s43
      %p49 = scmp.eq.s32.totalorder %s16, 0
      %p50 = por %p48, %p49
      %p51 = scmp.ne.s32.totalorder %s40, %s43
      %p52 = scmp.eq.s32.totalorder %s21, 1
      %p53 = por %p51, %p52
      %p54 = scmp.ne.s32.totalorder %s43, %s44
      %p55 = scmp.eq.s32.totalorder %s21, 0
      %p56 = por %p54, %p55
      %p57 = scmp.ne.s32.totalorder %s43, %s44
      %p58 = scmp.eq.s32.totalorder %s22, 1
      %p59 = por %p57, %p58
      %p61 = scmp.ne.s32.totalorder %s44, %s60
      %p62 = scmp.eq.s32.totalorder %s22, 0
      %p63 = por %p61, %p62
      %s64 = ssub.s32 %s23, %s35
      %s65 = ssub.s32 %s24, %s31
      %s66 = sor.u32 %s64, %s65
      %p67 = scmp.eq.s32.totalorder %s66, 0
      %s69 = sadd.s32 %s68, 1
      %s70 = scalar_select %p67, %s68, %s69
      %p73 = pneg %p67
      %p74 = scmp.eq.s32.totalorder %s16, 1
      %p75 = por %p73, %p74
      %p76 = scmp.ne.s32.totalorder %s68, %s71
      %p77 = scmp.eq.s32.totalorder %s16, 0
      %p78 = por %p76, %p77
      %p79 = scmp.ne.s32.totalorder %s68, %s71
      %p80 = scmp.eq.s32.totalorder %s21, 1
      %p81 = por %p79, %p80
      %p82 = scmp.ne.s32.totalorder %s71, %s72
      %p83 = scmp.eq.s32.totalorder %s21, 0
      %p84 = por %p82, %p83
      %p85 = scmp.ne.s32.totalorder %s71, %s72
      %p86 = scmp.eq.s32.totalorder %s22, 1
      %p87 = por %p85, %p86
      %p89 = scmp.ne.s32.totalorder %s72, %s88
      %p90 = scmp.eq.s32.totalorder %s22, 0
      %p91 = por %p89, %p90
      %s93 = sadd.s32 %s92, 1
      %p96 = scmp.eq.s32.totalorder %s16, 1
      %p97 = scmp.ne.s32.totalorder %s92, %s94
      %p98 = scmp.eq.s32.totalorder %s16, 0
      %p99 = por %p97, %p98
      %p100 = scmp.ne.s32.totalorder %s92, %s94
      %p101 = scmp.eq.s32.totalorder %s21, 1
      %p102 = por %p100, %p101
      %p103 = scmp.ne.s32.totalorder %s94, %s95
      %p104 = scmp.eq.s32.totalorder %s21, 0
      %p105 = por %p103, %p104
      %p106 = scmp.ne.s32.totalorder %s94, %s95
      %p107 = scmp.eq.s32.totalorder %s22, 1
      %p108 = por %p106, %p107
      %p110 = scmp.ne.s32.totalorder %s95, %s109
      %p111 = scmp.eq.s32.totalorder %s22, 0
      %p112 = por %p110, %p111
      %s114 = sadd.s32 %s113, 1
      %p117 = scmp.eq.s32.totalorder %s16, 1
      %p118 = scmp.ne.s32.totalorder %s113, %s115
      %p119 = scmp.eq.s32.totalorder %s16, 0
      %p120 = por %p118, %p119
      %p121 = scmp.ne.s32.totalorder %s113, %s115
      %p122 = scmp.eq.s32.totalorder %s21, 1
      %p123 = por %p121, %p122
      %p124 = scmp.ne.s32.totalorder %s115, %s116
      %p125 = scmp.eq.s32.totalorder %s21, 0
      %p126 = por %p124, %p125
      %p127 = scmp.ne.s32.totalorder %s115, %s116
      %p128 = scmp.eq.s32.totalorder %s22, 1
      %p129 = por %p127, %p128
      %p131 = scmp.ne.s32.totalorder %s116, %s130
      %p132 = scmp.eq.s32.totalorder %s22, 0
      %p133 = por %p131, %p132
      %s135 = sadd.s32 %s134, 1
      %p138 = scmp.eq.s32.totalorder %s16, 1
      %p139 = scmp.ne.s32.totalorder %s134, %s136
      %p140 = scmp.eq.s32.totalorder %s16, 0
      %p141 = por %p139, %p140
      %p142 = scmp.ne.s32.totalorder %s134, %s136
      %p143 = scmp.eq.s32.totalorder %s21, 1
      %p144 = por %p142, %p143
      %p145 = scmp.ne.s32.totalorder %s136, %s137
      %p146 = scmp.eq.s32.totalorder %s21, 0
      %p147 = por %p145, %p146
      %p148 = scmp.ne.s32.totalorder %s136, %s137
      %p149 = scmp.eq.s32.totalorder %s22, 1
      %p150 = por %p148, %p149
      %p152 = scmp.ne.s32.totalorder %s137, %s151
      %p153 = scmp.eq.s32.totalorder %s22, 0
      %p154 = por %p152, %p153
      %s156 = sadd.s32 %s155, 1
      %p159 = scmp.eq.s32.totalorder %s16, 1
      %p160 = scmp.ne.s32.totalorder %s155, %s157
      %p161 = scmp.eq.s32.totalorder %s16, 0
      %p162 = por %p160, %p161
      %p163 = scmp.ne.s32.totalorder %s155, %s157
      %p164 = scmp.eq.s32.totalorder %s21, 1
      %p165 = por %p163, %p164
      %p166 = scmp.ne.s32.totalorder %s157, %s158
      %p167 = scmp.eq.s32.totalorder %s21, 0
      %p168 = por %p166, %p167
      %p169 = scmp.ne.s32.totalorder %s157, %s158
      %p170 = scmp.eq.s32.totalorder %s22, 1
      %p171 = por %p169, %p170
      %p173 = scmp.ne.s32.totalorder %s158, %s172
      %p174 = scmp.eq.s32.totalorder %s22, 0
      %p175 = por %p173, %p174
      %s177 = sadd.s32 %s176, 1
      %p180 = scmp.eq.s32.totalorder %s16, 1
      %p181 = scmp.ne.s32.totalorder %s176, %s178
      %p182 = scmp.eq.s32.totalorder %s16, 0
      %p183 = por %p181, %p182
      %p184 = scmp.ne.s32.totalorder %s176, %s178
      %p185 = scmp.eq.s32.totalorder %s21, 1
      %p186 = por %p184, %p185
      %p187 = scmp.ne.s32.totalorder %s178, %s179
      %p188 = scmp.eq.s32.totalorder %s21, 0
      %p189 = por %p187, %p188
      %p190 = scmp.ne.s32.totalorder %s178, %s179
      %p191 = scmp.eq.s32.totalorder %s22, 1
      %p192 = por %p190, %p191
      %p194 = scmp.ne.s32.totalorder %s179, %s193
      %p195 = scmp.eq.s32.totalorder %s22, 0
      %p196 = por %p194, %p195
      %s197 = ssub.s32 %s23, %s35
      %s198 = ssub.s32 %s24, %s31
      %s199 = sor.u32 %s197, %s198
      %p200 = scmp.eq.s32.totalorder %s199, 0
      %s202 = sadd.s32 %s201, 1
      %s203 = scalar_select %p200, %s201, %s202
      %p206 = pneg %p200
      %p207 = scmp.eq.s32.totalorder %s16, 1
      %p208 = por %p206, %p207
      %p209 = scmp.ne.s32.totalorder %s201, %s204
      %p210 = scmp.eq.s32.totalorder %s16, 0
      %p211 = por %p209, %p210
      %p212 = scmp.ne.s32.totalorder %s201, %s204
      %p213 = scmp.eq.s32.totalorder %s21, 1
      %p214 = por %p212, %p213
      %p215 = scmp.ne.s32.totalorder %s204, %s205
      %p216 = scmp.eq.s32.totalorder %s21, 0
      %p217 = por %p215, %p216
      %p218 = scmp.ne.s32.totalorder %s204, %s205
      %p219 = scmp.eq.s32.totalorder %s22, 1
      %p220 = por %p218, %p219
      %p222 = scmp.ne.s32.totalorder %s205, %s221
      %p223 = scmp.eq.s32.totalorder %s22, 0
      %p224 = por %p222, %p223
      %p225 = scmp.le.s32.totalorder 1, %s16
      %p226 = scmp.lt.s32.totalorder %s16, 3
      %p227 = pnand %p225, %p226
      %p228 = pneg %p227
      // Predicated region
      $region9: #{pointnet_sa_module_votes.1} parent=5 // pred_check
        _
      $region10: #{pointnet_sa_module_votes.1} parent=5 // pred_check_branch
        %230 = sbr.rel (%p227) target = $region12
      $region11: #{pointnet_sa_module_votes.1} parent=5 // pred_region
        %s231 = ssub.s32 %s16, 1
        // Predicated region
        $region13: #{pointnet_sa_module_votes.1} parent=11 // pred_check
          %p232 = pneg %p105
        $region14: #{pointnet_sa_module_votes.1} parent=11 // pred_check_branch
          %234 = sbr.rel (%p232) target = $region16
        $region15: #{pointnet_sa_module_votes.1} parent=11 // pred_region
          _
        $region16: #{pointnet_sa_module_votes.1} parent=11 // pred_fallthru
          _
        // Predicated region
        $region17: #{pointnet_sa_module_votes.1} parent=11 // pred_check
          %p235 = pneg %p126
        $region18: #{pointnet_sa_module_votes.1} parent=11 // pred_check_branch
          %237 = sbr.rel (%p235) target = $region20
        $region19: #{pointnet_sa_module_votes.1} parent=11 // pred_region
          _
        $region20: #{pointnet_sa_module_votes.1} parent=11 // pred_fallthru
          _
        // Predicated region
        $region21: #{pointnet_sa_module_votes.1} parent=11 // pred_check
          %p238 = pneg %p147
        $region22: #{pointnet_sa_module_votes.1} parent=11 // pred_check_branch
          %240 = sbr.rel (%p238) target = $region24
        $region23: #{pointnet_sa_module_votes.1} parent=11 // pred_region
          _
        $region24: #{pointnet_sa_module_votes.1} parent=11 // pred_fallthru
          _
        // Predicated region
        $region25: #{pointnet_sa_module_votes.1} parent=11 // pred_check
          %p241 = pneg %p168
        $region26: #{pointnet_sa_module_votes.1} parent=11 // pred_check_branch
          %243 = sbr.rel (%p241) target = $region28
        $region27: #{pointnet_sa_module_votes.1} parent=11 // pred_region
          _
        $region28: #{pointnet_sa_module_votes.1} parent=11 // pred_fallthru
          _
        // Predicated region
        $region29: #{pointnet_sa_module_votes.1} parent=11 // pred_check
          %p244 = pneg %p189
        $region30: #{pointnet_sa_module_votes.1} parent=11 // pred_check_branch
          %246 = sbr.rel (%p244) target = $region32
        $region31: #{pointnet_sa_module_votes.1} parent=11 // pred_region
          _
        $region32: #{pointnet_sa_module_votes.1} parent=11 // pred_fallthru
          _
      $region12: #{pointnet_sa_module_votes.1} parent=5 // pred_fallthru
        _
      %p247 = scmp.lt.s32.totalorder %s16, 2
      // Predicated region
      $region33: #{pointnet_sa_module_votes.1} parent=5 // pred_check
        %p248 = pneg %p247
      $region34: #{pointnet_sa_module_votes.1} parent=5 // pred_check_branch
        %250 = sbr.rel (%p248) target = $region36
      $region35: #{pointnet_sa_module_votes.1} parent=5 // pred_region
        // Predicated region
        $region37: #{pointnet_sa_module_votes.1} parent=35 // pred_check
          %p251 = pneg %p50
        $region38: #{pointnet_sa_module_votes.1} parent=35 // pred_check_branch
          %253 = sbr.rel (%p251) target = $region40
        $region39: #{pointnet_sa_module_votes.1} parent=35 // pred_region
          %p254 = scmp.lt.s32.totalorder %s23, 1
          %s255 = scalar_select %p254, %s23, 1
          %p256 = scmp.lt.s32.totalorder %s24, 0
          %s257 = scalar_select %p256, %s24, 0
          %s258 = smul.addr %s257, 16
          %s259 = smul.addr %s255, 16
          %s260 = sadd.s32 %s258, %s259
          %s261 = smul.addr %s260, 4
          %s262 = scalar_lea.vmem %s0, %s261
        $region40: #{pointnet_sa_module_votes.1} parent=35 // pred_fallthru
          _
        // Predicated region
        $region41: #{pointnet_sa_module_votes.1} parent=35 // pred_check
          %p263 = pneg %p78
        $region42: #{pointnet_sa_module_votes.1} parent=35 // pred_check_branch
          %265 = sbr.rel (%p263) target = $region44
        $region43: #{pointnet_sa_module_votes.1} parent=35 // pred_region
          %p266 = scmp.lt.s32.totalorder %s23, 1
          %s267 = scalar_select %p266, %s23, 1
          %p268 = scmp.lt.s32.totalorder %s24, 0
          %s269 = scalar_select %p268, %s24, 0
          %s270 = smul.addr %s269, 16
          %s271 = smul.addr %s267, 16
          %s272 = sadd.s32 %s270, %s271
          %s273 = smul.addr %s272, 4
          %s274 = scalar_lea.vmem %s1, %s273
        $region44: #{pointnet_sa_module_votes.1} parent=35 // pred_fallthru
          _
      $region36: #{pointnet_sa_module_votes.1} parent=5 // pred_fallthru
        _
      %p275 = scmp.le.s32.totalorder 1, %s16
      %p276 = scmp.lt.s32.totalorder %s16, 3
      %p277 = pnand %p275, %p276
      %p278 = pneg %p277
      // Predicated region
      $region45: #{pointnet_sa_module_votes.1} parent=5 // pred_check
        _
      $region46: #{pointnet_sa_module_votes.1} parent=5 // pred_check_branch
        %280 = sbr.rel (%p277) target = $region48
      $region47: #{pointnet_sa_module_votes.1} parent=5 // pred_region
        %s281 = ssub.s32 %s16, 1
        %p282 = scmp.lt.s32.totalorder %s25, 1
        %s283 = scalar_select %p282, %s25, 1
        %p284 = scmp.lt.s32.totalorder %s26, 0
        %s285 = scalar_select %p284, %s26, 0
        %s286 = smul.addr %s285, 16
        %s287 = smul.addr %s283, 16
        %s288 = sadd.s32 %s286, %s287
        %s289 = smul.addr %s288, 4
        %s290 = scalar_lea.vmem %s0, %s289
        %p291 = pneg %p56
        %p292 = pneg %p53
        %p293 = scmp.lt.s32.totalorder %s25, 1
        %s294 = scalar_select %p293, %s25, 1
        %p295 = scmp.lt.s32.totalorder %s26, 0
        %s296 = scalar_select %p295, %s26, 0
        %s297 = smul.addr %s296, 16
        %s298 = smul.addr %s294, 16
        %s299 = sadd.s32 %s297, %s298
        %s300 = smul.addr %s299, 4
        %s301 = scalar_lea.vmem %s1, %s300
        %p302 = pneg %p84
        %p303 = pneg %p81
        %p304 = pneg %p105
        %p305 = pneg %p102
        %p306 = pneg %p126
        %p307 = pneg %p123
        %p308 = pneg %p147
        %p309 = pneg %p144
        %p310 = pneg %p168
        %p311 = pneg %p165
        %p312 = pneg %p189
        %p313 = pneg %p186
        %p314 = pneg %p217
        %p315 = pneg %p214
        %s316 = sand.u32 %s204, 1
        %s317 = scalar_lea.sflag [#allocation3], %s316
        %s318 = sand.u32 %s204, 1
        %s319 = smul.addr %s318, 64
        %s320 = scalar_lea.vmem [#allocation2], %s319
        %p321 = scmp.lt.s32.totalorder %s25, 1
        %s322 = scalar_select %p321, %s25, 1
        %p323 = scmp.lt.s32.totalorder %s26, 0
        %s324 = scalar_select %p323, %s26, 0
        %s325 = smul.addr %s324, 16
        %s326 = smul.addr %s322, 16
        %s327 = sadd.s32 %s325, %s326
        %s328 = smul.addr %s327, 4
        %s329 = scalar_lea.vmem %s0, %s328
        %p330 = scmp.lt.s32.totalorder %s25, 1
        %s331 = scalar_select %p330, %s25, 1
        %p332 = scmp.lt.s32.totalorder %s26, 0
        %s333 = scalar_select %p332, %s26, 0
        %s334 = smul.addr %s333, 16
        %s335 = smul.addr %s331, 16
        %s336 = sadd.s32 %s334, %s335
        %s337 = smul.addr %s336, 4
        %s338 = scalar_lea.vmem %s1, %s337
        %v340 = vld [vmem:[%s2] sm:$0xf]
        %v341 = vld [vmem:[%s2 + $0x4] sm:$0xf]
        %v342 = vld [vmem:[%s2 + $0x8] sm:$0xf]
        %v343 = vld [vmem:[%s2 + $0xc] sm:$0xf]
        %v344 = vld [vmem:[%s3] sm:$0xf]
        %v345 = vld [vmem:[%s3 + $0x4] sm:$0xf]
        %v346 = vld [vmem:[%s3 + $0x8] sm:$0xf]
        %v347 = vld [vmem:[%s3 + $0xc] sm:$0xf]
        %v348 = vld [vmem:[%s4] sm:$0xff]
        %v349 = vld [vmem:[%s4 + $0x8] sm:$0xff]
        %v350 = vld [vmem:[%s4 + $0x10] sm:$0xff]
        %v351 = vld [vmem:[%s4 + $0x18] sm:$0xff]
        %v352 = vld [vmem:[%s329] sm:$0xff]
        %v353 = vld [vmem:[%s329 + $0x8] sm:$0xff]
        %v354 = vld [vmem:[%s329 + $0x10] sm:$0xff]
        %v355 = vld [vmem:[%s329 + $0x18] sm:$0xff]
        %v356 = vld [vmem:[%s329 + $0x20] sm:$0xff]
        %v357 = vld [vmem:[%s329 + $0x28] sm:$0xff]
        %v358 = vld [vmem:[%s329 + $0x30] sm:$0xff]
        %v359 = vld [vmem:[%s329 + $0x38] sm:$0xff]
        %v360 = vld [vmem:[%s338] sm:$0xff]
        %v361 = vld [vmem:[%s338 + $0x8] sm:$0xff]
        %v362 = vld [vmem:[%s338 + $0x10] sm:$0xff]
        %v363 = vld [vmem:[%s338 + $0x18] sm:$0xff]
        %v364 = vld [vmem:[%s338 + $0x20] sm:$0xff]
        %v365 = vld [vmem:[%s338 + $0x28] sm:$0xff]
        %v366 = vld [vmem:[%s338 + $0x30] sm:$0xff]
        %v367 = vld [vmem:[%s338 + $0x38] sm:$0xff]
        %v372 = vunpack.c.l.b16 %v344
        %v373 = vunpack.c.l.b16 %v345
        %v374 = vunpack.c.l.b16 %v346
        %v375 = vunpack.c.l.b16 %v347
        %v376 = vpack.c.b16 %v373, %v372
        %v377 = vpack.c.b16 %v375, %v374
        %v386 = vunpack.c.l.b16 %v360
        %v387 = vunpack.c.h.b16 %v360
        %v388 = vunpack.c.l.b16 %v361
        %v389 = vunpack.c.h.b16 %v361
        %v390 = vunpack.c.l.b16 %v362
        %v391 = vunpack.c.h.b16 %v362
        %v392 = vunpack.c.l.b16 %v363
        %v393 = vunpack.c.h.b16 %v363
        %v394 = vunpack.c.l.b16 %v364
        %v395 = vunpack.c.h.b16 %v364
        %v396 = vunpack.c.l.b16 %v365
        %v397 = vunpack.c.h.b16 %v365
        %v398 = vunpack.c.l.b16 %v366
        %v399 = vunpack.c.h.b16 %v366
        %v400 = vunpack.c.l.b16 %v367
        %v401 = vunpack.c.h.b16 %v367
        %v402 = vpack.c.b16 %v386, %v386
        %v403 = vpack.c.b16 %v387, %v387
        %v404 = vpack.c.b16 %v388, %v388
        %v405 = vpack.c.b16 %v389, %v389
        %v406 = vpack.c.b16 %v390, %v390
        %v407 = vpack.c.b16 %v391, %v391
        %v408 = vpack.c.b16 %v392, %v392
        %v409 = vpack.c.b16 %v393, %v393
        %v410 = vpack.c.b16 %v394, %v394
        %v411 = vpack.c.b16 %v395, %v395
        %v412 = vpack.c.b16 %v396, %v396
        %v413 = vpack.c.b16 %v397, %v397
        %v414 = vpack.c.b16 %v398, %v398
        %v415 = vpack.c.b16 %v399, %v399
        %v416 = vpack.c.b16 %v400, %v400
        %v417 = vpack.c.b16 %v401, %v401
        %vm418 = vcmask 64512
        %v420 = vsel %vm418, %v376, 0
        %v423 = vsel %vm418, %v377, 0
        %vm425 = vcmask 1043456
        %v427 = vsel %vm425, %v402, 0
        %v430 = vsel %vm425, %v403, 0
        %v433 = vsel %vm425, %v404, 0
        %v436 = vsel %vm425, %v405, 0
        %v439 = vsel %vm425, %v406, 0
        %v442 = vsel %vm425, %v407, 0
        %v445 = vsel %vm425, %v408, 0
        %v448 = vsel %vm425, %v409, 0
        %v451 = vsel %vm425, %v410, 0
        %v454 = vsel %vm425, %v411, 0
        %v457 = vsel %vm425, %v412, 0
        %v460 = vsel %vm425, %v413, 0
        %v463 = vsel %vm425, %v414, 0
        %v466 = vsel %vm425, %v415, 0
        %v469 = vsel %vm425, %v416, 0
        %v472 = vsel %vm425, %v417, 0
        %474 = vmatprep.subr.bf16.mxu0 %v430
        %475 = vmatpush1.bf16.msra.mxu0 %v427
        %476 = vmatprep.subr.bf16.mxu0 0
        %477 = vmatpush1.bf16.msra.mxu0 0
        %478 = vmatprep.subr.bf16.mxu0 0
        %479 = vmatpush1.bf16.msra.mxu0 0
        %480 = vmatprep.subr.bf16.mxu0 0
        %481 = vmatpush1.bf16.msra.mxu0 0
        %482 = vmatprep.subr.bf16.mxu0 0
        %483 = vmatpush1.bf16.msra.mxu0 0
        %484 = vmatprep.subr.bf16.mxu0 0
        %485 = vmatpush1.bf16.msra.mxu0 0
        %486 = vmatprep.subr.bf16.mxu0 0
        %487 = vmatpush1.bf16.msra.mxu0 0
        %488 = vmatprep.subr.bf16.mxu0 0
        %489 = vmatpush1.bf16.msra.mxu0 0
        %490 = vmatprep.subr.bf16.mxu0 0
        %491 = vmatpush1.bf16.msra.mxu0 0
        %492 = vmatprep.subr.bf16.mxu0 0
        %493 = vmatpush1.bf16.msra.mxu0 0
        %494 = vmatprep.subr.bf16.mxu0 0
        %495 = vmatpush1.bf16.msra.mxu0 0
        %496 = vmatprep.subr.bf16.mxu0 0
        %497 = vmatpush1.bf16.msra.mxu0 0
        %498 = vmatprep.subr.bf16.mxu0 0
        %499 = vmatpush1.bf16.msra.mxu0 0
        %500 = vmatprep.subr.bf16.mxu0 0
        %501 = vmatpush1.bf16.msra.mxu0 0
        %502 = vmatprep.subr.bf16.mxu0 0
        %503 = vmatpush1.bf16.msra.mxu0 0
        %504 = vmatprep.subr.bf16.mxu0 0
        %505 = vmatpush1.bf16.msra.mxu0 0
        %506 = vmatprep.mubr.bf16.mxu0 0
        %507 = vmatmul.mubr.bf16.gmra.mrb[0].mxu0 %v420
        %v508 = vpop.f32.mrb[0].mxu0
        %v509 = vadd.f32 0.0, %v508
        %v510 = vpop.f32.mrb[0].mxu0
        %v511 = vadd.f32 0.0, %v510
        %v512 = vpop.f32.mrb[0].mxu0
        %v513 = vadd.f32 0.0, %v512
        %v514 = vpop.f32.mrb[0].mxu0
        %v515 = vadd.f32 0.0, %v514
        %516 = vmatprep.mubr.bf16.mxu0 0
        %517 = vmatmul.mubr.bf16.gmra.mrb[0].mxu0 %v423
        %v518 = vpop.f32.mrb[0].mxu0
        %v519 = vadd.f32 0.0, %v518
        %v520 = vpop.f32.mrb[0].mxu0
        %v521 = vadd.f32 0.0, %v520
        %v522 = vpop.f32.mrb[0].mxu0
        %v523 = vadd.f32 0.0, %v522
        %v524 = vpop.f32.mrb[0].mxu0
        %v525 = vadd.f32 0.0, %v524
        %526 = vdwg.mxu0
        %527 = vmatprep.subr.bf16.mxu0 %v436
        %528 = vmatpush1.bf16.msra.mxu0 %v433
        %529 = vmatprep.subr.bf16.mxu0 0
        %530 = vmatpush1.bf16.msra.mxu0 0
        %531 = vmatprep.subr.bf16.mxu0 0
        %532 = vmatpush1.bf16.msra.mxu0 0
        %533 = vmatprep.subr.bf16.mxu0 0
        %534 = vmatpush1.bf16.msra.mxu0 0
        %535 = vmatprep.subr.bf16.mxu0 0
        %536 = vmatpush1.bf16.msra.mxu0 0
        %537 = vmatprep.subr.bf16.mxu0 0
        %538 = vmatpush1.bf16.msra.mxu0 0
        %539 = vmatprep.subr.bf16.mxu0 0
        %540 = vmatpush1.bf16.msra.mxu0 0
        %541 = vmatprep.subr.bf16.mxu0 0
        %542 = vmatpush1.bf16.msra.mxu0 0
        %543 = vmatprep.subr.bf16.mxu0 0
        %544 = vmatpush1.bf16.msra.mxu0 0
        %545 = vmatprep.subr.bf16.mxu0 0
        %546 = vmatpush1.bf16.msra.mxu0 0
        %547 = vmatprep.subr.bf16.mxu0 0
        %548 = vmatpush1.bf16.msra.mxu0 0
        %549 = vmatprep.subr.bf16.mxu0 0
        %550 = vmatpush1.bf16.msra.mxu0 0
        %551 = vmatprep.subr.bf16.mxu0 0
        %552 = vmatpush1.bf16.msra.mxu0 0
        %553 = vmatprep.subr.bf16.mxu0 0
        %554 = vmatpush1.bf16.msra.mxu0 0
        %555 = vmatprep.subr.bf16.mxu0 0
        %556 = vmatpush1.bf16.msra.mxu0 0
        %557 = vmatprep.subr.bf16.mxu0 0
        %558 = vmatpush1.bf16.msra.mxu0 0
        %559 = vmatprep.mubr.bf16.mxu0 0
        %560 = vmatmul.mubr.bf16.gmra.mrb[0].mxu0 %v420
        %v561 = vpop.f32.mrb[0].mxu0
        %v562 = vadd.f32 0.0, %v561
        %v563 = vpop.f32.mrb[0].mxu0
        %v564 = vadd.f32 0.0, %v563
        %v565 = vpop.f32.mrb[0].mxu0
        %v566 = vadd.f32 0.0, %v565
        %v567 = vpop.f32.mrb[0].mxu0
        %v568 = vadd.f32 0.0, %v567
        %569 = vmatprep.mubr.bf16.mxu0 0
        %570 = vmatmul.mubr.bf16.gmra.mrb[0].mxu0 %v423
        %v571 = vpop.f32.mrb[0].mxu0
        %v572 = vadd.f32 0.0, %v571
        %v573 = vpop.f32.mrb[0].mxu0
        %v574 = vadd.f32 0.0, %v573
        %v575 = vpop.f32.mrb[0].mxu0
        %v576 = vadd.f32 0.0, %v575
        %v577 = vpop.f32.mrb[0].mxu0
        %v578 = vadd.f32 0.0, %v577
        %579 = vdwg.mxu0
        %580 = vmatprep.subr.bf16.mxu0 %v442
        %581 = vmatpush1.bf16.msra.mxu0 %v439
        %582 = vmatprep.subr.bf16.mxu0 0
        %583 = vmatpush1.bf16.msra.mxu0 0
        %584 = vmatprep.subr.bf16.mxu0 0
        %585 = vmatpush1.bf16.msra.mxu0 0
        %586 = vmatprep.subr.bf16.mxu0 0
        %587 = vmatpush1.bf16.msra.mxu0 0
        %588 = vmatprep.subr.bf16.mxu0 0
        %589 = vmatpush1.bf16.msra.mxu0 0
        %590 = vmatprep.subr.bf16.mxu0 0
        %591 = vmatpush1.bf16.msra.mxu0 0
        %592 = vmatprep.subr.bf16.mxu0 0
        %593 = vmatpush1.bf16.msra.mxu0 0
        %594 = vmatprep.subr.bf16.mxu0 0
        %595 = vmatpush1.bf16.msra.mxu0 0
        %596 = vmatprep.subr.bf16.mxu0 0
        %597 = vmatpush1.bf16.msra.mxu0 0
        %598 = vmatprep.subr.bf16.mxu0 0
        %599 = vmatpush1.bf16.msra.mxu0 0
        %600 = vmatprep.subr.bf16.mxu0 0
        %601 = vmatpush1.bf16.msra.mxu0 0
        %602 = vmatprep.subr.bf16.mxu0 0
        %603 = vmatpush1.bf16.msra.mxu0 0
        %604 = vmatprep.subr.bf16.mxu0 0
        %605 = vmatpush1.bf16.msra.mxu0 0
        %606 = vmatprep.subr.bf16.mxu0 0
        %607 = vmatpush1.bf16.msra.mxu0 0
        %608 = vmatprep.subr.bf16.mxu0 0
        %609 = vmatpush1.bf16.msra.mxu0 0
        %610 = vmatprep.subr.bf16.mxu0 0
        %611 = vmatpush1.bf16.msra.mxu0 0
        %612 = vmatprep.mubr.bf16.mxu0 0
        %613 = vmatmul.mubr.bf16.gmra.mrb[0].mxu0 %v420
        %v614 = vpop.f32.mrb[0].mxu0
        %v615 = vadd.f32 0.0, %v614
        %v616 = vpop.f32.mrb[0].mxu0
        %v617 = vadd.f32 0.0, %v616
        %v618 = vpop.f32.mrb[0].mxu0
        %v619 = vadd.f32 0.0, %v618
        %v620 = vpop.f32.mrb[0].mxu0
        %v621 = vadd.f32 0.0, %v620
        %622 = vmatprep.mubr.bf16.mxu0 0
        %623 = vmatmul.mubr.bf16.gmra.mrb[0].mxu0 %v423
        %v624 = vpop.f32.mrb[0].mxu0
        %v625 = vadd.f32 0.0, %v624
        %v626 = vpop.f32.mrb[0].mxu0
        %v627 = vadd.f32 0.0, %v626
        %v628 = vpop.f32.mrb[0].mxu0
        %v629 = vadd.f32 0.0, %v628
        %v630 = vpop.f32.mrb[0].mxu0
        %v631 = vadd.f32 0.0, %v630
        %632 = vdwg.mxu0
        %633 = vmatprep.subr.bf16.mxu0 %v448
        %634 = vmatpush1.bf16.msra.mxu0 %v445
        %635 = vmatprep.subr.bf16.mxu0 0
        %636 = vmatpush1.bf16.msra.mxu0 0
        %637 = vmatprep.subr.bf16.mxu0 0
        %638 = vmatpush1.bf16.msra.mxu0 0
        %639 = vmatprep.subr.bf16.mxu0 0
        %640 = vmatpush1.bf16.msra.mxu0 0
        %641 = vmatprep.subr.bf16.mxu0 0
        %642 = vmatpush1.bf16.msra.mxu0 0
        %643 = vmatprep.subr.bf16.mxu0 0
        %644 = vmatpush1.bf16.msra.mxu0 0
        %645 = vmatprep.subr.bf16.mxu0 0
        %646 = vmatpush1.bf16.msra.mxu0 0
        %647 = vmatprep.subr.bf16.mxu0 0
        %648 = vmatpush1.bf16.msra.mxu0 0
        %649 = vmatprep.subr.bf16.mxu0 0
        %650 = vmatpush1.bf16.msra.mxu0 0
        %651 = vmatprep.subr.bf16.mxu0 0
        %652 = vmatpush1.bf16.msra.mxu0 0
        %653 = vmatprep.subr.bf16.mxu0 0
        %654 = vmatpush1.bf16.msra.mxu0 0
        %655 = vmatprep.subr.bf16.mxu0 0
        %656 = vmatpush1.bf16.msra.mxu0 0
        %657 = vmatprep.subr.bf16.mxu0 0
        %658 = vmatpush1.bf16.msra.mxu0 0
        %659 = vmatprep.subr.bf16.mxu0 0
        %660 = vmatpush1.bf16.msra.mxu0 0
        %661 = vmatprep.subr.bf16.mxu0 0
        %662 = vmatpush1.bf16.msra.mxu0 0
        %663 = vmatprep.subr.bf16.mxu0 0
        %664 = vmatpush1.bf16.msra.mxu0 0
        %665 = vmatprep.mubr.bf16.mxu0 0
        %666 = vmatmul.mubr.bf16.gmra.mrb[0].mxu0 %v420
        %v667 = vpop.f32.mrb[0].mxu0
        %v668 = vadd.f32 0.0, %v667
        %v669 = vpop.f32.mrb[0].mxu0
        %v670 = vadd.f32 0.0, %v669
        %v671 = vpop.f32.mrb[0].mxu0
        %v672 = vadd.f32 0.0, %v671
        %v673 = vpop.f32.mrb[0].mxu0
        %v674 = vadd.f32 0.0, %v673
        %675 = vmatprep.mubr.bf16.mxu0 0
        %676 = vmatmul.mubr.bf16.gmra.mrb[0].mxu0 %v423
        %v677 = vpop.f32.mrb[0].mxu0
        %v678 = vadd.f32 0.0, %v677
        %v679 = vpop.f32.mrb[0].mxu0
        %v680 = vadd.f32 0.0, %v679
        %v681 = vpop.f32.mrb[0].mxu0
        %v682 = vadd.f32 0.0, %v681
        %v683 = vpop.f32.mrb[0].mxu0
        %v684 = vadd.f32 0.0, %v683
        %685 = vdwg.mxu0
        %686 = vmatprep.subr.bf16.mxu0 %v454
        %687 = vmatpush1.bf16.msra.mxu0 %v451
        %688 = vmatprep.subr.bf16.mxu0 0
        %689 = vmatpush1.bf16.msra.mxu0 0
        %690 = vmatprep.subr.bf16.mxu0 0
        %691 = vmatpush1.bf16.msra.mxu0 0
        %692 = vmatprep.subr.bf16.mxu0 0
        %693 = vmatpush1.bf16.msra.mxu0 0
        %694 = vmatprep.subr.bf16.mxu0 0
        %695 = vmatpush1.bf16.msra.mxu0 0
        %696 = vmatprep.subr.bf16.mxu0 0
        %697 = vmatpush1.bf16.msra.mxu0 0
        %698 = vmatprep.subr.bf16.mxu0 0
        %699 = vmatpush1.bf16.msra.mxu0 0
        %700 = vmatprep.subr.bf16.mxu0 0
        %701 = vmatpush1.bf16.msra.mxu0 0
        %702 = vmatprep.subr.bf16.mxu0 0
        %703 = vmatpush1.bf16.msra.mxu0 0
        %704 = vmatprep.subr.bf16.mxu0 0
        %705 = vmatpush1.bf16.msra.mxu0 0
        %706 = vmatprep.subr.bf16.mxu0 0
        %707 = vmatpush1.bf16.msra.mxu0 0
        %708 = vmatprep.subr.bf16.mxu0 0
        %709 = vmatpush1.bf16.msra.mxu0 0
        %710 = vmatprep.subr.bf16.mxu0 0
        %711 = vmatpush1.bf16.msra.mxu0 0
        %712 = vmatprep.subr.bf16.mxu0 0
        %713 = vmatpush1.bf16.msra.mxu0 0
        %714 = vmatprep.subr.bf16.mxu0 0
        %715 = vmatpush1.bf16.msra.mxu0 0
        %716 = vmatprep.subr.bf16.mxu0 0
        %717 = vmatpush1.bf16.msra.mxu0 0
        %718 = vmatprep.mubr.bf16.mxu0 0
        %719 = vmatmul.mubr.bf16.gmra.mrb[0].mxu0 %v420
        %v720 = vpop.f32.mrb[0].mxu0
        %v721 = vadd.f32 0.0, %v720
        %v722 = vpop.f32.mrb[0].mxu0
        %v723 = vadd.f32 0.0, %v722
        %v724 = vpop.f32.mrb[0].mxu0
        %v725 = vadd.f32 0.0, %v724
        %v726 = vpop.f32.mrb[0].mxu0
        %v727 = vadd.f32 0.0, %v726
        %728 = vmatprep.mubr.bf16.mxu0 0
        %729 = vmatmul.mubr.bf16.gmra.mrb[0].mxu0 %v423
        %v730 = vpop.f32.mrb[0].mxu0
        %v731 = vadd.f32 0.0, %v730
        %v732 = vpop.f32.mrb[0].mxu0
        %v733 = vadd.f32 0.0, %v732
        %v734 = vpop.f32.mrb[0].mxu0
        %v735 = vadd.f32 0.0, %v734
        %v736 = vpop.f32.mrb[0].mxu0
        %v737 = vadd.f32 0.0, %v736
        %738 = vdwg.mxu0
        %739 = vmatprep.subr.bf16.mxu0 %v460
        %740 = vmatpush1.bf16.msra.mxu0 %v457
        %741 = vmatprep.subr.bf16.mxu0 0
        %742 = vmatpush1.bf16.msra.mxu0 0
        %743 = vmatprep.subr.bf16.mxu0 0
        %744 = vmatpush1.bf16.msra.mxu0 0
        %745 = vmatprep.subr.bf16.mxu0 0
        %746 = vmatpush1.bf16.msra.mxu0 0
        %747 = vmatprep.subr.bf16.mxu0 0
        %748 = vmatpush1.bf16.msra.mxu0 0
        %749 = vmatprep.subr.bf16.mxu0 0
        %750 = vmatpush1.bf16.msra.mxu0 0
        %751 = vmatprep.subr.bf16.mxu0 0
        %752 = vmatpush1.bf16.msra.mxu0 0
        %753 = vmatprep.subr.bf16.mxu0 0
        %754 = vmatpush1.bf16.msra.mxu0 0
        %755 = vmatprep.subr.bf16.mxu0 0
        %756 = vmatpush1.bf16.msra.mxu0 0
        %757 = vmatprep.subr.bf16.mxu0 0
        %758 = vmatpush1.bf16.msra.mxu0 0
        %759 = vmatprep.subr.bf16.mxu0 0
        %760 = vmatpush1.bf16.msra.mxu0 0
        %761 = vmatprep.subr.bf16.mxu0 0
        %762 = vmatpush1.bf16.msra.mxu0 0
        %763 = vmatprep.subr.bf16.mxu0 0
        %764 = vmatpush1.bf16.msra.mxu0 0
        %765 = vmatprep.subr.bf16.mxu0 0
        %766 = vmatpush1.bf16.msra.mxu0 0
        %767 = vmatprep.subr.bf16.mxu0 0
        %768 = vmatpush1.bf16.msra.mxu0 0
        %769 = vmatprep.subr.bf16.mxu0 0
        %770 = vmatpush1.bf16.msra.mxu0 0
        %771 = vmatprep.mubr.bf16.mxu0 0
        %772 = vmatmul.mubr.bf16.gmra.mrb[0].mxu0 %v420
        %v773 = vpop.f32.mrb[0].mxu0
        %v774 = vadd.f32 0.0, %v773
        %v775 = vpop.f32.mrb[0].mxu0
        %v776 = vadd.f32 0.0, %v775
        %v777 = vpop.f32.mrb[0].mxu0
        %v778 = vadd.f32 0.0, %v777
        %v779 = vpop.f32.mrb[0].mxu0
        %v780 = vadd.f32 0.0, %v779
        %781 = vmatprep.mubr.bf16.mxu0 0
        %782 = vmatmul.mubr.bf16.gmra.mrb[0].mxu0 %v423
        %v783 = vpop.f32.mrb[0].mxu0
        %v784 = vadd.f32 0.0, %v783
        %v785 = vpop.f32.mrb[0].mxu0
        %v786 = vadd.f32 0.0, %v785
        %v787 = vpop.f32.mrb[0].mxu0
        %v788 = vadd.f32 0.0, %v787
        %v789 = vpop.f32.mrb[0].mxu0
        %v790 = vadd.f32 0.0, %v789
        %791 = vdwg.mxu0
        %792 = vmatprep.subr.bf16.mxu0 %v466
        %793 = vmatpush1.bf16.msra.mxu0 %v463
        %794 = vmatprep.subr.bf16.mxu0 0
        %795 = vmatpush1.bf16.msra.mxu0 0
        %796 = vmatprep.subr.bf16.mxu0 0
        %797 = vmatpush1.bf16.msra.mxu0 0
        %798 = vmatprep.subr.bf16.mxu0 0
        %799 = vmatpush1.bf16.msra.mxu0 0
        %800 = vmatprep.subr.bf16.mxu0 0
        %801 = vmatpush1.bf16.msra.mxu0 0
        %802 = vmatprep.subr.bf16.mxu0 0
        %803 = vmatpush1.bf16.msra.mxu0 0
        %804 = vmatprep.subr.bf16.mxu0 0
        %805 = vmatpush1.bf16.msra.mxu0 0
        %806 = vmatprep.subr.bf16.mxu0 0
        %807 = vmatpush1.bf16.msra.mxu0 0
        %808 = vmatprep.subr.bf16.mxu0 0
        %809 = vmatpush1.bf16.msra.mxu0 0
        %810 = vmatprep.subr.bf16.mxu0 0
        %811 = vmatpush1.bf16.msra.mxu0 0
        %812 = vmatprep.subr.bf16.mxu0 0
        %813 = vmatpush1.bf16.msra.mxu0 0
        %814 = vmatprep.subr.bf16.mxu0 0
        %815 = vmatpush1.bf16.msra.mxu0 0
        %816 = vmatprep.subr.bf16.mxu0 0
        %817 = vmatpush1.bf16.msra.mxu0 0
        %818 = vmatprep.subr.bf16.mxu0 0
        %819 = vmatpush1.bf16.msra.mxu0 0
        %820 = vmatprep.subr.bf16.mxu0 0
        %821 = vmatpush1.bf16.msra.mxu0 0
        %822 = vmatprep.subr.bf16.mxu0 0
        %823 = vmatpush1.bf16.msra.mxu0 0
        %824 = vmatprep.mubr.bf16.mxu0 0
        %825 = vmatmul.mubr.bf16.gmra.mrb[0].mxu0 %v420
        %v826 = vpop.f32.mrb[0].mxu0
        %v827 = vadd.f32 0.0, %v826
        %v828 = vpop.f32.mrb[0].mxu0
        %v829 = vadd.f32 0.0, %v828
        %v830 = vpop.f32.mrb[0].mxu0
        %v831 = vadd.f32 0.0, %v830
        %v832 = vpop.f32.mrb[0].mxu0
        %v833 = vadd.f32 0.0, %v832
        %834 = vmatprep.mubr.bf16.mxu0 0
        %835 = vmatmul.mubr.bf16.gmra.mrb[0].mxu0 %v423
        %v836 = vpop.f32.mrb[0].mxu0
        %v837 = vadd.f32 0.0, %v836
        %v838 = vpop.f32.mrb[0].mxu0
        %v839 = vadd.f32 0.0, %v838
        %v840 = vpop.f32.mrb[0].mxu0
        %v841 = vadd.f32 0.0, %v840
        %v842 = vpop.f32.mrb[0].mxu0
        %v843 = vadd.f32 0.0, %v842
        %844 = vdwg.mxu0
        %845 = vmatprep.subr.bf16.mxu0 %v472
        %846 = vmatpush1.bf16.msra.mxu0 %v469
        %847 = vmatprep.subr.bf16.mxu0 0
        %848 = vmatpush1.bf16.msra.mxu0 0
        %849 = vmatprep.subr.bf16.mxu0 0
        %850 = vmatpush1.bf16.msra.mxu0 0
        %851 = vmatprep.subr.bf16.mxu0 0
        %852 = vmatpush1.bf16.msra.mxu0 0
        %853 = vmatprep.subr.bf16.mxu0 0
        %854 = vmatpush1.bf16.msra.mxu0 0
        %855 = vmatprep.subr.bf16.mxu0 0
        %856 = vmatpush1.bf16.msra.mxu0 0
        %857 = vmatprep.subr.bf16.mxu0 0
        %858 = vmatpush1.bf16.msra.mxu0 0
        %859 = vmatprep.subr.bf16.mxu0 0
        %860 = vmatpush1.bf16.msra.mxu0 0
        %861 = vmatprep.subr.bf16.mxu0 0
        %862 = vmatpush1.bf16.msra.mxu0 0
        %863 = vmatprep.subr.bf16.mxu0 0
        %864 = vmatpush1.bf16.msra.mxu0 0
        %865 = vmatprep.subr.bf16.mxu0 0
        %866 = vmatpush1.bf16.msra.mxu0 0
        %867 = vmatprep.subr.bf16.mxu0 0
        %868 = vmatpush1.bf16.msra.mxu0 0
        %869 = vmatprep.subr.bf16.mxu0 0
        %870 = vmatpush1.bf16.msra.mxu0 0
        %871 = vmatprep.subr.bf16.mxu0 0
        %872 = vmatpush1.bf16.msra.mxu0 0
        %873 = vmatprep.subr.bf16.mxu0 0
        %874 = vmatpush1.bf16.msra.mxu0 0
        %875 = vmatprep.subr.bf16.mxu0 0
        %876 = vmatpush1.bf16.msra.mxu0 0
        %877 = vmatprep.mubr.bf16.mxu0 0
        %878 = vmatmul.mubr.bf16.gmra.mrb[0].mxu0 %v420
        %v879 = vpop.f32.mrb[0].mxu0
        %v880 = vadd.f32 0.0, %v879
        %v881 = vpop.f32.mrb[0].mxu0
        %v882 = vadd.f32 0.0, %v881
        %v883 = vpop.f32.mrb[0].mxu0
        %v884 = vadd.f32 0.0, %v883
        %v885 = vpop.f32.mrb[0].mxu0
        %v886 = vadd.f32 0.0, %v885
        %887 = vmatprep.mubr.bf16.mxu0 0
        %888 = vmatmul.mubr.bf16.gmra.mrb[0].mxu0 %v423
        %v889 = vpop.f32.mrb[0].mxu0
        %v890 = vadd.f32 0.0, %v889
        %v891 = vpop.f32.mrb[0].mxu0
        %v892 = vadd.f32 0.0, %v891
        %v893 = vpop.f32.mrb[0].mxu0
        %v894 = vadd.f32 0.0, %v893
        %v895 = vpop.f32.mrb[0].mxu0
        %v896 = vadd.f32 0.0, %v895
        %897 = vdwg.mxu0
        %v902 = vunpack.c.l.b16 %v340
        %v903 = vunpack.c.l.b16 %v341
        %v904 = vunpack.c.l.b16 %v342
        %v905 = vunpack.c.l.b16 %v343
        %v906 = vpack.c.b16 %v903, %v902
        %v907 = vpack.c.b16 %v905, %v904
        %v916 = vunpack.c.l.b16 %v352
        %v917 = vunpack.c.h.b16 %v352
        %v918 = vunpack.c.l.b16 %v353
        %v919 = vunpack.c.h.b16 %v353
        %v920 = vunpack.c.l.b16 %v354
        %v921 = vunpack.c.h.b16 %v354
        %v922 = vunpack.c.l.b16 %v355
        %v923 = vunpack.c.h.b16 %v355
        %v924 = vunpack.c.l.b16 %v356
        %v925 = vunpack.c.h.b16 %v356
        %v926 = vunpack.c.l.b16 %v357
        %v927 = vunpack.c.h.b16 %v357
        %v928 = vunpack.c.l.b16 %v358
        %v929 = vunpack.c.h.b16 %v358
        %v930 = vunpack.c.l.b16 %v359
        %v931 = vunpack.c.h.b16 %v359
        %v932 = vpack.c.b16 %v916, %v916
        %v933 = vpack.c.b16 %v917, %v917
        %v934 = vpack.c.b16 %v918, %v918
        %v935 = vpack.c.b16 %v919, %v919
        %v936 = vpack.c.b16 %v920, %v920
        %v937 = vpack.c.b16 %v921, %v921
        %v938 = vpack.c.b16 %v922, %v922
        %v939 = vpack.c.b16 %v923, %v923
        %v940 = vpack.c.b16 %v924, %v924
        %v941 = vpack.c.b16 %v925, %v925
        %v942 = vpack.c.b16 %v926, %v926
        %v943 = vpack.c.b16 %v927, %v927
        %v944 = vpack.c.b16 %v928, %v928
        %v945 = vpack.c.b16 %v929, %v929
        %v946 = vpack.c.b16 %v930, %v930
        %v947 = vpack.c.b16 %v931, %v931
        %v949 = vsel %vm418, %v906, 0
        %v952 = vsel %vm418, %v907, 0
        %v955 = vsel %vm425, %v932, 0
        %v958 = vsel %vm425, %v933, 0
        %v961 = vsel %vm425, %v934, 0
        %v964 = vsel %vm425, %v935, 0
        %v967 = vsel %vm425, %v936, 0
        %v970 = vsel %vm425, %v937, 0
        %v973 = vsel %vm425, %v938, 0
        %v976 = vsel %vm425, %v939, 0
        %v979 = vsel %vm425, %v940, 0
        %v982 = vsel %vm425, %v941, 0
        %v985 = vsel %vm425, %v942, 0
        %v988 = vsel %vm425, %v943, 0
        %v991 = vsel %vm425, %v944, 0
        %v994 = vsel %vm425, %v945, 0
        %v997 = vsel %vm425, %v946, 0
        %v1000 = vsel %vm425, %v947, 0
        %1002 = vmatprep.subr.bf16.mxu0 %v958
        %1003 = vmatpush1.bf16.msra.mxu0 %v955
        %1004 = vmatprep.subr.bf16.mxu0 0
        %1005 = vmatpush1.bf16.msra.mxu0 0
        %1006 = vmatprep.subr.bf16.mxu0 0
        %1007 = vmatpush1.bf16.msra.mxu0 0
        %1008 = vmatprep.subr.bf16.mxu0 0
        %1009 = vmatpush1.bf16.msra.mxu0 0
        %1010 = vmatprep.subr.bf16.mxu0 0
        %1011 = vmatpush1.bf16.msra.mxu0 0
        %1012 = vmatprep.subr.bf16.mxu0 0
        %1013 = vmatpush1.bf16.msra.mxu0 0
        %1014 = vmatprep.subr.bf16.mxu0 0
        %1015 = vmatpush1.bf16.msra.mxu0 0
        %1016 = vmatprep.subr.bf16.mxu0 0
        %1017 = vmatpush1.bf16.msra.mxu0 0
        %1018 = vmatprep.subr.bf16.mxu0 0
        %1019 = vmatpush1.bf16.msra.mxu0 0
        %1020 = vmatprep.subr.bf16.mxu0 0
        %1021 = vmatpush1.bf16.msra.mxu0 0
        %1022 = vmatprep.subr.bf16.mxu0 0
        %1023 = vmatpush1.bf16.msra.mxu0 0
        %1024 = vmatprep.subr.bf16.mxu0 0
        %1025 = vmatpush1.bf16.msra.mxu0 0
        %1026 = vmatprep.subr.bf16.mxu0 0
        %1027 = vmatpush1.bf16.msra.mxu0 0
        %1028 = vmatprep.subr.bf16.mxu0 0
        %1029 = vmatpush1.bf16.msra.mxu0 0
        %1030 = vmatprep.subr.bf16.mxu0 0
        %1031 = vmatpush1.bf16.msra.mxu0 0
        %1032 = vmatprep.subr.bf16.mxu0 0
        %1033 = vmatpush1.bf16.msra.mxu0 0
        %1034 = vmatprep.mubr.bf16.mxu0 0
        %1035 = vmatmul.mubr.bf16.gmra.mrb[0].mxu0 %v949
        %v1036 = vpop.f32.mrb[0].mxu0
        %v1037 = vadd.f32 %v509, %v1036
        %v1038 = vpop.f32.mrb[0].mxu0
        %v1039 = vadd.f32 %v511, %v1038
        %v1040 = vpop.f32.mrb[0].mxu0
        %v1041 = vadd.f32 %v513, %v1040
        %v1042 = vpop.f32.mrb[0].mxu0
        %v1043 = vadd.f32 %v515, %v1042
        %1044 = vmatprep.mubr.bf16.mxu0 0
        %1045 = vmatmul.mubr.bf16.gmra.mrb[0].mxu0 %v952
        %v1046 = vpop.f32.mrb[0].mxu0
        %v1047 = vadd.f32 %v519, %v1046
        %v1048 = vpop.f32.mrb[0].mxu0
        %v1049 = vadd.f32 %v521, %v1048
        %v1050 = vpop.f32.mrb[0].mxu0
        %v1051 = vadd.f32 %v523, %v1050
        %v1052 = vpop.f32.mrb[0].mxu0
        %v1053 = vadd.f32 %v525, %v1052
        %1054 = vdwg.mxu0
        %1055 = vmatprep.subr.bf16.mxu0 %v964
        %1056 = vmatpush1.bf16.msra.mxu0 %v961
        %1057 = vmatprep.subr.bf16.mxu0 0
        %1058 = vmatpush1.bf16.msra.mxu0 0
        %1059 = vmatprep.subr.bf16.mxu0 0
        %1060 = vmatpush1.bf16.msra.mxu0 0
        %1061 = vmatprep.subr.bf16.mxu0 0
        %1062 = vmatpush1.bf16.msra.mxu0 0
        %1063 = vmatprep.subr.bf16.mxu0 0
        %1064 = vmatpush1.bf16.msra.mxu0 0
        %1065 = vmatprep.subr.bf16.mxu0 0
        %1066 = vmatpush1.bf16.msra.mxu0 0
        %1067 = vmatprep.subr.bf16.mxu0 0
        %1068 = vmatpush1.bf16.msra.mxu0 0
        %1069 = vmatprep.subr.bf16.mxu0 0
        %1070 = vmatpush1.bf16.msra.mxu0 0
        %1071 = vmatprep.subr.bf16.mxu0 0
        %1072 = vmatpush1.bf16.msra.mxu0 0
        %1073 = vmatprep.subr.bf16.mxu0 0
        %1074 = vmatpush1.bf16.msra.mxu0 0
        %1075 = vmatprep.subr.bf16.mxu0 0
        %1076 = vmatpush1.bf16.msra.mxu0 0
        %1077 = vmatprep.subr.bf16.mxu0 0
        %1078 = vmatpush1.bf16.msra.mxu0 0
        %1079 = vmatprep.subr.bf16.mxu0 0
        %1080 = vmatpush1.bf16.msra.mxu0 0
        %1081 = vmatprep.subr.bf16.mxu0 0
        %1082 = vmatpush1.bf16.msra.mxu0 0
        %1083 = vmatprep.subr.bf16.mxu0 0
        %1084 = vmatpush1.bf16.msra.mxu0 0
        %1085 = vmatprep.subr.bf16.mxu0 0
        %1086 = vmatpush1.bf16.msra.mxu0 0
        %1087 = vmatprep.mubr.bf16.mxu0 0
        %1088 = vmatmul.mubr.bf16.gmra.mrb[0].mxu0 %v949
        %v1089 = vpop.f32.mrb[0].mxu0
        %v1090 = vadd.f32 %v562, %v1089
        %v1091 = vpop.f32.mrb[0].mxu0
        %v1092 = vadd.f32 %v564, %v1091
        %v1093 = vpop.f32.mrb[0].mxu0
        %v1094 = vadd.f32 %v566, %v1093
        %v1095 = vpop.f32.mrb[0].mxu0
        %v1096 = vadd.f32 %v568, %v1095
        %1097 = vmatprep.mubr.bf16.mxu0 0
        %1098 = vmatmul.mubr.bf16.gmra.mrb[0].mxu0 %v952
        %v1099 = vpop.f32.mrb[0].mxu0
        %v1100 = vadd.f32 %v572, %v1099
        %v1101 = vpop.f32.mrb[0].mxu0
        %v1102 = vadd.f32 %v574, %v1101
        %v1103 = vpop.f32.mrb[0].mxu0
        %v1104 = vadd.f32 %v576, %v1103
        %v1105 = vpop.f32.mrb[0].mxu0
        %v1106 = vadd.f32 %v578, %v1105
        %1107 = vdwg.mxu0
        %1108 = vmatprep.subr.bf16.mxu0 %v970
        %1109 = vmatpush1.bf16.msra.mxu0 %v967
        %1110 = vmatprep.subr.bf16.mxu0 0
        %1111 = vmatpush1.bf16.msra.mxu0 0
        %1112 = vmatprep.subr.bf16.mxu0 0
        %1113 = vmatpush1.bf16.msra.mxu0 0
        %1114 = vmatprep.subr.bf16.mxu0 0
        %1115 = vmatpush1.bf16.msra.mxu0 0
        %1116 = vmatprep.subr.bf16.mxu0 0
        %1117 = vmatpush1.bf16.msra.mxu0 0
        %1118 = vmatprep.subr.bf16.mxu0 0
        %1119 = vmatpush1.bf16.msra.mxu0 0
        %1120 = vmatprep.subr.bf16.mxu0 0
        %1121 = vmatpush1.bf16.msra.mxu0 0
        %1122 = vmatprep.subr.bf16.mxu0 0
        %1123 = vmatpush1.bf16.msra.mxu0 0
        %1124 = vmatprep.subr.bf16.mxu0 0
        %1125 = vmatpush1.bf16.msra.mxu0 0
        %1126 = vmatprep.subr.bf16.mxu0 0
        %1127 = vmatpush1.bf16.msra.mxu0 0
        %1128 = vmatprep.subr.bf16.mxu0 0
        %1129 = vmatpush1.bf16.msra.mxu0 0
        %1130 = vmatprep.subr.bf16.mxu0 0
        %1131 = vmatpush1.bf16.msra.mxu0 0
        %1132 = vmatprep.subr.bf16.mxu0 0
        %1133 = vmatpush1.bf16.msra.mxu0 0
        %1134 = vmatprep.subr.bf16.mxu0 0
        %1135 = vmatpush1.bf16.msra.mxu0 0
        %1136 = vmatprep.subr.bf16.mxu0 0
        %1137 = vmatpush1.bf16.msra.mxu0 0
        %1138 = vmatprep.subr.bf16.mxu0 0
        %1139 = vmatpush1.bf16.msra.mxu0 0
        %1140 = vmatprep.mubr.bf16.mxu0 0
        %1141 = vmatmul.mubr.bf16.gmra.mrb[0].mxu0 %v949
        %v1142 = vpop.f32.mrb[0].mxu0
        %v1143 = vadd.f32 %v615, %v1142
        %v1144 = vpop.f32.mrb[0].mxu0
        %v1145 = vadd.f32 %v617, %v1144
        %v1146 = vpop.f32.mrb[0].mxu0
        %v1147 = vadd.f32 %v619, %v1146
        %v1148 = vpop.f32.mrb[0].mxu0
        %v1149 = vadd.f32 %v621, %v1148
        %1150 = vmatprep.mubr.bf16.mxu0 0
        %1151 = vmatmul.mubr.bf16.gmra.mrb[0].mxu0 %v952
        %v1152 = vpop.f32.mrb[0].mxu0
        %v1153 = vadd.f32 %v625, %v1152
        %v1154 = vpop.f32.mrb[0].mxu0
        %v1155 = vadd.f32 %v627, %v1154
        %v1156 = vpop.f32.mrb[0].mxu0
        %v1157 = vadd.f32 %v629, %v1156
        %v1158 = vpop.f32.mrb[0].mxu0
        %v1159 = vadd.f32 %v631, %v1158
        %1160 = vdwg.mxu0
        %1161 = vmatprep.subr.bf16.mxu0 %v976
        %1162 = vmatpush1.bf16.msra.mxu0 %v973
        %1163 = vmatprep.subr.bf16.mxu0 0
        %1164 = vmatpush1.bf16.msra.mxu0 0
        %1165 = vmatprep.subr.bf16.mxu0 0
        %1166 = vmatpush1.bf16.msra.mxu0 0
        %1167 = vmatprep.subr.bf16.mxu0 0
        %1168 = vmatpush1.bf16.msra.mxu0 0
        %1169 = vmatprep.subr.bf16.mxu0 0
        %1170 = vmatpush1.bf16.msra.mxu0 0
        %1171 = vmatprep.subr.bf16.mxu0 0
        %1172 = vmatpush1.bf16.msra.mxu0 0
        %1173 = vmatprep.subr.bf16.mxu0 0
        %1174 = vmatpush1.bf16.msra.mxu0 0
        %1175 = vmatprep.subr.bf16.mxu0 0
        %1176 = vmatpush1.bf16.msra.mxu0 0
        %1177 = vmatprep.subr.bf16.mxu0 0
        %1178 = vmatpush1.bf16.msra.mxu0 0
        %1179 = vmatprep.subr.bf16.mxu0 0
        %1180 = vmatpush1.bf16.msra.mxu0 0
        %1181 = vmatprep.subr.bf16.mxu0 0
        %1182 = vmatpush1.bf16.msra.mxu0 0
        %1183 = vmatprep.subr.bf16.mxu0 0
        %1184 = vmatpush1.bf16.msra.mxu0 0
        %1185 = vmatprep.subr.bf16.mxu0 0
        %1186 = vmatpush1.bf16.msra.mxu0 0
        %1187 = vmatprep.subr.bf16.mxu0 0
        %1188 = vmatpush1.bf16.msra.mxu0 0
        %1189 = vmatprep.subr.bf16.mxu0 0
        %1190 = vmatpush1.bf16.msra.mxu0 0
        %1191 = vmatprep.subr.bf16.mxu0 0
        %1192 = vmatpush1.bf16.msra.mxu0 0
        %1193 = vmatprep.mubr.bf16.mxu0 0
        %1194 = vmatmul.mubr.bf16.gmra.mrb[0].mxu0 %v949
        %v1195 = vpop.f32.mrb[0].mxu0
        %v1196 = vadd.f32 %v668, %v1195
        %v1197 = vpop.f32.mrb[0].mxu0
        %v1198 = vadd.f32 %v670, %v1197
        %v1199 = vpop.f32.mrb[0].mxu0
        %v1200 = vadd.f32 %v672, %v1199
        %v1201 = vpop.f32.mrb[0].mxu0
        %v1202 = vadd.f32 %v674, %v1201
        %1203 = vmatprep.mubr.bf16.mxu0 0
        %1204 = vmatmul.mubr.bf16.gmra.mrb[0].mxu0 %v952
        %v1205 = vpop.f32.mrb[0].mxu0
        %v1206 = vadd.f32 %v678, %v1205
        %v1207 = vpop.f32.mrb[0].mxu0
        %v1208 = vadd.f32 %v680, %v1207
        %v1209 = vpop.f32.mrb[0].mxu0
        %v1210 = vadd.f32 %v682, %v1209
        %v1211 = vpop.f32.mrb[0].mxu0
        %v1212 = vadd.f32 %v684, %v1211
        %1213 = vdwg.mxu0
        %1214 = vmatprep.subr.bf16.mxu0 %v982
        %1215 = vmatpush1.bf16.msra.mxu0 %v979
        %1216 = vmatprep.subr.bf16.mxu0 0
        %1217 = vmatpush1.bf16.msra.mxu0 0
        %1218 = vmatprep.subr.bf16.mxu0 0
        %1219 = vmatpush1.bf16.msra.mxu0 0
        %1220 = vmatprep.subr.bf16.mxu0 0
        %1221 = vmatpush1.bf16.msra.mxu0 0
        %1222 = vmatprep.subr.bf16.mxu0 0
        %1223 = vmatpush1.bf16.msra.mxu0 0
        %1224 = vmatprep.subr.bf16.mxu0 0
        %1225 = vmatpush1.bf16.msra.mxu0 0
        %1226 = vmatprep.subr.bf16.mxu0 0
        %1227 = vmatpush1.bf16.msra.mxu0 0
        %1228 = vmatprep.subr.bf16.mxu0 0
        %1229 = vmatpush1.bf16.msra.mxu0 0
        %1230 = vmatprep.subr.bf16.mxu0 0
        %1231 = vmatpush1.bf16.msra.mxu0 0
        %1232 = vmatprep.subr.bf16.mxu0 0
        %1233 = vmatpush1.bf16.msra.mxu0 0
        %1234 = vmatprep.subr.bf16.mxu0 0
        %1235 = vmatpush1.bf16.msra.mxu0 0
        %1236 = vmatprep.subr.bf16.mxu0 0
        %1237 = vmatpush1.bf16.msra.mxu0 0
        %1238 = vmatprep.subr.bf16.mxu0 0
        %1239 = vmatpush1.bf16.msra.mxu0 0
        %1240 = vmatprep.subr.bf16.mxu0 0
        %1241 = vmatpush1.bf16.msra.mxu0 0
        %1242 = vmatprep.subr.bf16.mxu0 0
        %1243 = vmatpush1.bf16.msra.mxu0 0
        %1244 = vmatprep.subr.bf16.mxu0 0
        %1245 = vmatpush1.bf16.msra.mxu0 0
        %1246 = vmatprep.mubr.bf16.mxu0 0
        %1247 = vmatmul.mubr.bf16.gmra.mrb[0].mxu0 %v949
        %v1248 = vpop.f32.mrb[0].mxu0
        %v1249 = vadd.f32 %v721, %v1248
        %v1250 = vpop.f32.mrb[0].mxu0
        %v1251 = vadd.f32 %v723, %v1250
        %v1252 = vpop.f32.mrb[0].mxu0
        %v1253 = vadd.f32 %v725, %v1252
        %v1254 = vpop.f32.mrb[0].mxu0
        %v1255 = vadd.f32 %v727, %v1254
        %1256 = vmatprep.mubr.bf16.mxu0 0
        %1257 = vmatmul.mubr.bf16.gmra.mrb[0].mxu0 %v952
        %v1258 = vpop.f32.mrb[0].mxu0
        %v1259 = vadd.f32 %v731, %v1258
        %v1260 = vpop.f32.mrb[0].mxu0
        %v1261 = vadd.f32 %v733, %v1260
        %v1262 = vpop.f32.mrb[0].mxu0
        %v1263 = vadd.f32 %v735, %v1262
        %v1264 = vpop.f32.mrb[0].mxu0
        %v1265 = vadd.f32 %v737, %v1264
        %1266 = vdwg.mxu0
        %1267 = vmatprep.subr.bf16.mxu0 %v988
        %1268 = vmatpush1.bf16.msra.mxu0 %v985
        %1269 = vmatprep.subr.bf16.mxu0 0
        %1270 = vmatpush1.bf16.msra.mxu0 0
        %1271 = vmatprep.subr.bf16.mxu0 0
        %1272 = vmatpush1.bf16.msra.mxu0 0
        %1273 = vmatprep.subr.bf16.mxu0 0
        %1274 = vmatpush1.bf16.msra.mxu0 0
        %1275 = vmatprep.subr.bf16.mxu0 0
        %1276 = vmatpush1.bf16.msra.mxu0 0
        %1277 = vmatprep.subr.bf16.mxu0 0
        %1278 = vmatpush1.bf16.msra.mxu0 0
        %1279 = vmatprep.subr.bf16.mxu0 0
        %1280 = vmatpush1.bf16.msra.mxu0 0
        %1281 = vmatprep.subr.bf16.mxu0 0
        %1282 = vmatpush1.bf16.msra.mxu0 0
        %1283 = vmatprep.subr.bf16.mxu0 0
        %1284 = vmatpush1.bf16.msra.mxu0 0
        %1285 = vmatprep.subr.bf16.mxu0 0
        %1286 = vmatpush1.bf16.msra.mxu0 0
        %1287 = vmatprep.subr.bf16.mxu0 0
        %1288 = vmatpush1.bf16.msra.mxu0 0
        %1289 = vmatprep.subr.bf16.mxu0 0
        %1290 = vmatpush1.bf16.msra.mxu0 0
        %1291 = vmatprep.subr.bf16.mxu0 0
        %1292 = vmatpush1.bf16.msra.mxu0 0
        %1293 = vmatprep.subr.bf16.mxu0 0
        %1294 = vmatpush1.bf16.msra.mxu0 0
        %1295 = vmatprep.subr.bf16.mxu0 0
        %1296 = vmatpush1.bf16.msra.mxu0 0
        %1297 = vmatprep.subr.bf16.mxu0 0
        %1298 = vmatpush1.bf16.msra.mxu0 0
        %1299 = vmatprep.mubr.bf16.mxu0 0
        %1300 = vmatmul.mubr.bf16.gmra.mrb[0].mxu0 %v949
        %v1301 = vpop.f32.mrb[0].mxu0
        %v1302 = vadd.f32 %v774, %v1301
        %v1303 = vpop.f32.mrb[0].mxu0
        %v1304 = vadd.f32 %v776, %v1303
        %v1305 = vpop.f32.mrb[0].mxu0
        %v1306 = vadd.f32 %v778, %v1305
        %v1307 = vpop.f32.mrb[0].mxu0
        %v1308 = vadd.f32 %v780, %v1307
        %1309 = vmatprep.mubr.bf16.mxu0 0
        %1310 = vmatmul.mubr.bf16.gmra.mrb[0].mxu0 %v952
        %v1311 = vpop.f32.mrb[0].mxu0
        %v1312 = vadd.f32 %v784, %v1311
        %v1313 = vpop.f32.mrb[0].mxu0
        %v1314 = vadd.f32 %v786, %v1313
        %v1315 = vpop.f32.mrb[0].mxu0
        %v1316 = vadd.f32 %v788, %v1315
        %v1317 = vpop.f32.mrb[0].mxu0
        %v1318 = vadd.f32 %v790, %v1317
        %1319 = vdwg.mxu0
        %1320 = vmatprep.subr.bf16.mxu0 %v994
        %1321 = vmatpush1.bf16.msra.mxu0 %v991
        %1322 = vmatprep.subr.bf16.mxu0 0
        %1323 = vmatpush1.bf16.msra.mxu0 0
        %1324 = vmatprep.subr.bf16.mxu0 0
        %1325 = vmatpush1.bf16.msra.mxu0 0
        %1326 = vmatprep.subr.bf16.mxu0 0
        %1327 = vmatpush1.bf16.msra.mxu0 0
        %1328 = vmatprep.subr.bf16.mxu0 0
        %1329 = vmatpush1.bf16.msra.mxu0 0
        %1330 = vmatprep.subr.bf16.mxu0 0
        %1331 = vmatpush1.bf16.msra.mxu0 0
        %1332 = vmatprep.subr.bf16.mxu0 0
        %1333 = vmatpush1.bf16.msra.mxu0 0
        %1334 = vmatprep.subr.bf16.mxu0 0
        %1335 = vmatpush1.bf16.msra.mxu0 0
        %1336 = vmatprep.subr.bf16.mxu0 0
        %1337 = vmatpush1.bf16.msra.mxu0 0
        %1338 = vmatprep.subr.bf16.mxu0 0
        %1339 = vmatpush1.bf16.msra.mxu0 0
        %1340 = vmatprep.subr.bf16.mxu0 0
        %1341 = vmatpush1.bf16.msra.mxu0 0
        %1342 = vmatprep.subr.bf16.mxu0 0
        %1343 = vmatpush1.bf16.msra.mxu0 0
        %1344 = vmatprep.subr.bf16.mxu0 0
        %1345 = vmatpush1.bf16.msra.mxu0 0
        %1346 = vmatprep.subr.bf16.mxu0 0
        %1347 = vmatpush1.bf16.msra.mxu0 0
        %1348 = vmatprep.subr.bf16.mxu0 0
        %1349 = vmatpush1.bf16.msra.mxu0 0
        %1350 = vmatprep.subr.bf16.mxu0 0
        %1351 = vmatpush1.bf16.msra.mxu0 0
        %1352 = vmatprep.mubr.bf16.mxu0 0
        %1353 = vmatmul.mubr.bf16.gmra.mrb[0].mxu0 %v949
        %v1354 = vpop.f32.mrb[0].mxu0
        %v1355 = vadd.f32 %v827, %v1354
        %v1356 = vpop.f32.mrb[0].mxu0
        %v1357 = vadd.f32 %v829, %v1356
        %v1358 = vpop.f32.mrb[0].mxu0
        %v1359 = vadd.f32 %v831, %v1358
        %v1360 = vpop.f32.mrb[0].mxu0
        %v1361 = vadd.f32 %v833, %v1360
        %1362 = vmatprep.mubr.bf16.mxu0 0
        %1363 = vmatmul.mubr.bf16.gmra.mrb[0].mxu0 %v952
        %v1364 = vpop.f32.mrb[0].mxu0
        %v1365 = vadd.f32 %v837, %v1364
        %v1366 = vpop.f32.mrb[0].mxu0
        %v1367 = vadd.f32 %v839, %v1366
        %v1368 = vpop.f32.mrb[0].mxu0
        %v1369 = vadd.f32 %v841, %v1368
        %v1370 = vpop.f32.mrb[0].mxu0
        %v1371 = vadd.f32 %v843, %v1370
        %1372 = vdwg.mxu0
        %1373 = vmatprep.subr.bf16.mxu0 %v1000
        %1374 = vmatpush1.bf16.msra.mxu0 %v997
        %1375 = vmatprep.subr.bf16.mxu0 0
        %1376 = vmatpush1.bf16.msra.mxu0 0
        %1377 = vmatprep.subr.bf16.mxu0 0
        %1378 = vmatpush1.bf16.msra.mxu0 0
        %1379 = vmatprep.subr.bf16.mxu0 0
        %1380 = vmatpush1.bf16.msra.mxu0 0
        %1381 = vmatprep.subr.bf16.mxu0 0
        %1382 = vmatpush1.bf16.msra.mxu0 0
        %1383 = vmatprep.subr.bf16.mxu0 0
        %1384 = vmatpush1.bf16.msra.mxu0 0
        %1385 = vmatprep.subr.bf16.mxu0 0
        %1386 = vmatpush1.bf16.msra.mxu0 0
        %1387 = vmatprep.subr.bf16.mxu0 0
        %1388 = vmatpush1.bf16.msra.mxu0 0
        %1389 = vmatprep.subr.bf16.mxu0 0
        %1390 = vmatpush1.bf16.msra.mxu0 0
        %1391 = vmatprep.subr.bf16.mxu0 0
        %1392 = vmatpush1.bf16.msra.mxu0 0
        %1393 = vmatprep.subr.bf16.mxu0 0
        %1394 = vmatpush1.bf16.msra.mxu0 0
        %1395 = vmatprep.subr.bf16.mxu0 0
        %1396 = vmatpush1.bf16.msra.mxu0 0
        %1397 = vmatprep.subr.bf16.mxu0 0
        %1398 = vmatpush1.bf16.msra.mxu0 0
        %1399 = vmatprep.subr.bf16.mxu0 0
        %1400 = vmatpush1.bf16.msra.mxu0 0
        %1401 = vmatprep.subr.bf16.mxu0 0
        %1402 = vmatpush1.bf16.msra.mxu0 0
        %1403 = vmatprep.subr.bf16.mxu0 0
        %1404 = vmatpush1.bf16.msra.mxu0 0
        %1405 = vmatprep.mubr.bf16.mxu0 0
        %1406 = vmatmul.mubr.bf16.gmra.mrb[0].mxu0 %v949
        %v1407 = vpop.f32.mrb[0].mxu0
        %v1408 = vadd.f32 %v880, %v1407
        %v1409 = vpop.f32.mrb[0].mxu0
        %v1410 = vadd.f32 %v882, %v1409
        %v1411 = vpop.f32.mrb[0].mxu0
        %v1412 = vadd.f32 %v884, %v1411
        %v1413 = vpop.f32.mrb[0].mxu0
        %v1414 = vadd.f32 %v886, %v1413
        %1415 = vmatprep.mubr.bf16.mxu0 0
        %1416 = vmatmul.mubr.bf16.gmra.mrb[0].mxu0 %v952
        %v1417 = vpop.f32.mrb[0].mxu0
        %v1418 = vadd.f32 %v890, %v1417
        %v1419 = vpop.f32.mrb[0].mxu0
        %v1420 = vadd.f32 %v892, %v1419
        %v1421 = vpop.f32.mrb[0].mxu0
        %v1422 = vadd.f32 %v894, %v1421
        %v1423 = vpop.f32.mrb[0].mxu0
        %v1424 = vadd.f32 %v896, %v1423
        %1425 = vdwg.mxu0
        %1427 = vset.pattern.permute.xlu0 0
        %1428 = vperm.xlu0 %1427, %v348
        %v1429 = vpop.permute.xlu0 %1428
        %1432 = vset.pattern.permute.xlu0 0
        %1433 = vperm.xlu0 %1432, %v349
        %v1434 = vpop.permute.xlu0 %1433
        %1437 = vset.pattern.permute.xlu0 0
        %1438 = vperm.xlu0 %1437, %v350
        %v1439 = vpop.permute.xlu0 %1438
        %1442 = vset.pattern.permute.xlu0 0
        %1443 = vperm.xlu0 %1442, %v351
        %v1444 = vpop.permute.xlu0 %1443
        %v1446 = vadd.f32 %v1037, %v1429
        %v1447 = vadd.f32 %v1039, %v1429
        %v1448 = vadd.f32 %v1090, %v1429
        %v1449 = vadd.f32 %v1092, %v1429
        %v1450 = vadd.f32 %v1143, %v1429
        %v1451 = vadd.f32 %v1145, %v1429
        %v1452 = vadd.f32 %v1196, %v1429
        %v1453 = vadd.f32 %v1198, %v1429
        %v1454 = vadd.f32 %v1249, %v1429
        %v1455 = vadd.f32 %v1251, %v1429
        %v1456 = vadd.f32 %v1302, %v1429
        %v1457 = vadd.f32 %v1304, %v1429
        %v1458 = vadd.f32 %v1355, %v1429
        %v1459 = vadd.f32 %v1357, %v1429
        %v1460 = vadd.f32 %v1408, %v1429
        %v1461 = vadd.f32 %v1410, %v1429
        %v1462 = vadd.f32 %v1041, %v1434
        %v1463 = vadd.f32 %v1043, %v1434
        %v1464 = vadd.f32 %v1094, %v1434
        %v1465 = vadd.f32 %v1096, %v1434
        %v1466 = vadd.f32 %v1147, %v1434
        %v1467 = vadd.f32 %v1149, %v1434
        %v1468 = vadd.f32 %v1200, %v1434
        %v1469 = vadd.f32 %v1202, %v1434
        %v1470 = vadd.f32 %v1253, %v1434
        %v1471 = vadd.f32 %v1255, %v1434
        %v1472 = vadd.f32 %v1306, %v1434
        %v1473 = vadd.f32 %v1308, %v1434
        %v1474 = vadd.f32 %v1359, %v1434
        %v1475 = vadd.f32 %v1361, %v1434
        %v1476 = vadd.f32 %v1412, %v1434
        %v1477 = vadd.f32 %v1414, %v1434
        %v1478 = vadd.f32 %v1047, %v1439
        %v1479 = vadd.f32 %v1049, %v1439
        %v1480 = vadd.f32 %v1100, %v1439
        %v1481 = vadd.f32 %v1102, %v1439
        %v1482 = vadd.f32 %v1153, %v1439
        %v1483 = vadd.f32 %v1155, %v1439
        %v1484 = vadd.f32 %v1206, %v1439
        %v1485 = vadd.f32 %v1208, %v1439
        %v1486 = vadd.f32 %v1259, %v1439
        %v1487 = vadd.f32 %v1261, %v1439
        %v1488 = vadd.f32 %v1312, %v1439
        %v1489 = vadd.f32 %v1314, %v1439
        %v1490 = vadd.f32 %v1365, %v1439
        %v1491 = vadd.f32 %v1367, %v1439
        %v1492 = vadd.f32 %v1418, %v1439
        %v1493 = vadd.f32 %v1420, %v1439
        %v1494 = vadd.f32 %v1051, %v1444
        %v1495 = vadd.f32 %v1053, %v1444
        %v1496 = vadd.f32 %v1104, %v1444
        %v1497 = vadd.f32 %v1106, %v1444
        %v1498 = vadd.f32 %v1157, %v1444
        %v1499 = vadd.f32 %v1159, %v1444
        %v1500 = vadd.f32 %v1210, %v1444
        %v1501 = vadd.f32 %v1212, %v1444
        %v1502 = vadd.f32 %v1263, %v1444
        %v1503 = vadd.f32 %v1265, %v1444
        %v1504 = vadd.f32 %v1316, %v1444
        %v1505 = vadd.f32 %v1318, %v1444
        %v1506 = vadd.f32 %v1369, %v1444
        %v1507 = vadd.f32 %v1371, %v1444
        %v1508 = vadd.f32 %v1422, %v1444
        %v1509 = vadd.f32 %v1424, %v1444
        %v1510 = vmax.f32 %v1446, 0.0
        %v1511 = vmax.f32 %v1447, 0.0
        %v1512 = vmax.f32 %v1448, 0.0
        %v1513 = vmax.f32 %v1449, 0.0
        %v1514 = vmax.f32 %v1450, 0.0
        %v1515 = vmax.f32 %v1451, 0.0
        %v1516 = vmax.f32 %v1452, 0.0
        %v1517 = vmax.f32 %v1453, 0.0
        %v1518 = vmax.f32 %v1454, 0.0
        %v1519 = vmax.f32 %v1455, 0.0
        %v1520 = vmax.f32 %v1456, 0.0
        %v1521 = vmax.f32 %v1457, 0.0
        %v1522 = vmax.f32 %v1458, 0.0
        %v1523 = vmax.f32 %v1459, 0.0
        %v1524 = vmax.f32 %v1460, 0.0
        %v1525 = vmax.f32 %v1461, 0.0
        %v1526 = vmax.f32 %v1462, 0.0
        %v1527 = vmax.f32 %v1463, 0.0
        %v1528 = vmax.f32 %v1464, 0.0
        %v1529 = vmax.f32 %v1465, 0.0
        %v1530 = vmax.f32 %v1466, 0.0
        %v1531 = vmax.f32 %v1467, 0.0
        %v1532 = vmax.f32 %v1468, 0.0
        %v1533 = vmax.f32 %v1469, 0.0
        %v1534 = vmax.f32 %v1470, 0.0
        %v1535 = vmax.f32 %v1471, 0.0
        %v1536 = vmax.f32 %v1472, 0.0
        %v1537 = vmax.f32 %v1473, 0.0
        %v1538 = vmax.f32 %v1474, 0.0
        %v1539 = vmax.f32 %v1475, 0.0
        %v1540 = vmax.f32 %v1476, 0.0
        %v1541 = vmax.f32 %v1477, 0.0
        %v1542 = vmax.f32 %v1478, 0.0
        %v1543 = vmax.f32 %v1479, 0.0
        %v1544 = vmax.f32 %v1480, 0.0
        %v1545 = vmax.f32 %v1481, 0.0
        %v1546 = vmax.f32 %v1482, 0.0
        %v1547 = vmax.f32 %v1483, 0.0
        %v1548 = vmax.f32 %v1484, 0.0
        %v1549 = vmax.f32 %v1485, 0.0
        %v1550 = vmax.f32 %v1486, 0.0
        %v1551 = vmax.f32 %v1487, 0.0
        %v1552 = vmax.f32 %v1488, 0.0
        %v1553 = vmax.f32 %v1489, 0.0
        %v1554 = vmax.f32 %v1490, 0.0
        %v1555 = vmax.f32 %v1491, 0.0
        %v1556 = vmax.f32 %v1492, 0.0
        %v1557 = vmax.f32 %v1493, 0.0
        %v1558 = vmax.f32 %v1494, 0.0
        %v1559 = vmax.f32 %v1495, 0.0
        %v1560 = vmax.f32 %v1496, 0.0
        %v1561 = vmax.f32 %v1497, 0.0
        %v1562 = vmax.f32 %v1498, 0.0
        %v1563 = vmax.f32 %v1499, 0.0
        %v1564 = vmax.f32 %v1500, 0.0
        %v1565 = vmax.f32 %v1501, 0.0
        %v1566 = vmax.f32 %v1502, 0.0
        %v1567 = vmax.f32 %v1503, 0.0
        %v1568 = vmax.f32 %v1504, 0.0
        %v1569 = vmax.f32 %v1505, 0.0
        %v1570 = vmax.f32 %v1506, 0.0
        %v1571 = vmax.f32 %v1507, 0.0
        %v1572 = vmax.f32 %v1508, 0.0
        %v1573 = vmax.f32 %v1509, 0.0
        %v1574 = vld [vmem:[%s5] sm:$0xf]
        %v1575 = vld [vmem:[%s5 + $0x4] sm:$0xf]
        %v1576 = vld [vmem:[%s5 + $0x8] sm:$0xf]
        %v1577 = vld [vmem:[%s5 + $0xc] sm:$0xf]
        %v1578 = vld [vmem:[%s5 + $0x10] sm:$0xf]
        %v1579 = vld [vmem:[%s5 + $0x14] sm:$0xf]
        %v1580 = vld [vmem:[%s5 + $0x18] sm:$0xf]
        %v1581 = vld [vmem:[%s5 + $0x1c] sm:$0xf]
        %v1582 = vld [vmem:[%s6] sm:$0xff]
        %v1583 = vld [vmem:[%s6 + $0x8] sm:$0xff]
        %v1584 = vld [vmem:[%s6 + $0x10] sm:$0xff]
        %v1585 = vld [vmem:[%s6 + $0x18] sm:$0xff]
        %v1586 = vld [vmem:[%s6 + $0x20] sm:$0xff]
        %v1587 = vld [vmem:[%s6 + $0x28] sm:$0xff]
        %v1588 = vld [vmem:[%s6 + $0x30] sm:$0xff]
        %v1589 = vld [vmem:[%s6 + $0x38] sm:$0xff]
        %v1590 = vpack.c.bf16 %v1526, %v1510
        %v1591 = vpack.c.bf16 %v1527, %v1511
        %v1592 = vpack.c.bf16 %v1528, %v1512
        %v1593 = vpack.c.bf16 %v1529, %v1513
        %v1594 = vpack.c.bf16 %v1530, %v1514
        %v1595 = vpack.c.bf16 %v1531, %v1515
        %v1596 = vpack.c.bf16 %v1532, %v1516
        %v1597 = vpack.c.bf16 %v1533, %v1517
        %v1598 = vpack.c.bf16 %v1534, %v1518
        %v1599 = vpack.c.bf16 %v1535, %v1519
        %v1600 = vpack.c.bf16 %v1536, %v1520
        %v1601 = vpack.c.bf16 %v1537, %v1521
        %v1602 = vpack.c.bf16 %v1538, %v1522
        %v1603 = vpack.c.bf16 %v1539, %v1523
        %v1604 = vpack.c.bf16 %v1540, %v1524
        %v1605 = vpack.c.bf16 %v1541, %v1525
        %v1606 = vpack.c.bf16 %v1558, %v1542
        %v1607 = vpack.c.bf16 %v1559, %v1543
        %v1608 = vpack.c.bf16 %v1560, %v1544
        %v1609 = vpack.c.bf16 %v1561, %v1545
        %v1610 = vpack.c.bf16 %v1562, %v1546
        %v1611 = vpack.c.bf16 %v1563, %v1547
        %v1612 = vpack.c.bf16 %v1564, %v1548
        %v1613 = vpack.c.bf16 %v1565, %v1549
        %v1614 = vpack.c.bf16 %v1566, %v1550
        %v1615 = vpack.c.bf16 %v1567, %v1551
        %v1616 = vpack.c.bf16 %v1568, %v1552
        %v1617 = vpack.c.bf16 %v1569, %v1553
        %v1618 = vpack.c.bf16 %v1570, %v1554
        %v1619 = vpack.c.bf16 %v1571, %v1555
        %v1620 = vpack.c.bf16 %v1572, %v1556
        %v1621 = vpack.c.bf16 %v1573, %v1557
        %1623 = vset.pattern.permute.xlu0 0
        %1624 = vperm.xlu0 %1623, %v1582
        %v1625 = vpop.permute.xlu0 %1624
        %1628 = vset.pattern.permute.xlu0 0
        %1629 = vperm.xlu0 %1628, %v1583
        %v1630 = vpop.permute.xlu0 %1629
        %1633 = vset.pattern.permute.xlu0 0
        %1634 = vperm.xlu0 %1633, %v1584
        %v1635 = vpop.permute.xlu0 %1634
        %1638 = vset.pattern.permute.xlu0 0
        %1639 = vperm.xlu0 %1638, %v1585
        %v1640 = vpop.permute.xlu0 %1639
        %1643 = vset.pattern.permute.xlu0 0
        %1644 = vperm.xlu0 %1643, %v1586
        %v1645 = vpop.permute.xlu0 %1644
        %1648 = vset.pattern.permute.xlu0 0
        %1649 = vperm.xlu0 %1648, %v1587
        %v1650 = vpop.permute.xlu0 %1649
        %1653 = vset.pattern.permute.xlu0 0
        %1654 = vperm.xlu0 %1653, %v1588
        %v1655 = vpop.permute.xlu0 %1654
        %1658 = vset.pattern.permute.xlu0 0
        %1659 = vperm.xlu0 %1658, %v1589
        %v1660 = vpop.permute.xlu0 %1659
        %v1670 = vunpack.c.l.b16 %v1574
        %v1671 = vunpack.c.l.b16 %v1575
        %v1672 = vunpack.c.l.b16 %v1576
        %v1673 = vunpack.c.l.b16 %v1577
        %v1674 = vunpack.c.l.b16 %v1578
        %v1675 = vunpack.c.l.b16 %v1579
        %v1676 = vunpack.c.l.b16 %v1580
        %v1677 = vunpack.c.l.b16 %v1581
        %v1678 = vpack.c.b16 %v1671, %v1670
        %v1679 = vpack.c.b16 %v1673, %v1672
        %v1680 = vpack.c.b16 %v1675, %v1674
        %v1681 = vpack.c.b16 %v1677, %v1676
        %vm1682 = vcmask 261120
        %v1684 = vsel %vm1682, %v1678, 0
        %v1687 = vsel %vm1682, %v1679, 0
        %v1690 = vsel %vm1682, %v1680, 0
        %v1693 = vsel %vm1682, %v1681, 0
        %1695 = vmatprep.subr.bf16.mxu0 %v1591
        %1696 = vmatpush1.bf16.msra.mxu0 %v1590
        %1697 = vmatprep.subr.bf16.mxu0 %v1607
        %1698 = vmatpush1.bf16.msra.mxu0 %v1606
        %1699 = vmatprep.subr.bf16.mxu0 0
        %1700 = vmatpush1.bf16.msra.mxu0 0
        %1701 = vmatprep.subr.bf16.mxu0 0
        %1702 = vmatpush1.bf16.msra.mxu0 0
        %1703 = vmatprep.subr.bf16.mxu0 0
        %1704 = vmatpush1.bf16.msra.mxu0 0
        %1705 = vmatprep.subr.bf16.mxu0 0
        %1706 = vmatpush1.bf16.msra.mxu0 0
        %1707 = vmatprep.subr.bf16.mxu0 0
        %1708 = vmatpush1.bf16.msra.mxu0 0
        %1709 = vmatprep.subr.bf16.mxu0 0
        %1710 = vmatpush1.bf16.msra.mxu0 0
        %1711 = vmatprep.subr.bf16.mxu0 0
        %1712 = vmatpush1.bf16.msra.mxu0 0
        %1713 = vmatprep.subr.bf16.mxu0 0
        %1714 = vmatpush1.bf16.msra.mxu0 0
        %1715 = vmatprep.subr.bf16.mxu0 0
        %1716 = vmatpush1.bf16.msra.mxu0 0
        %1717 = vmatprep.subr.bf16.mxu0 0
        %1718 = vmatpush1.bf16.msra.mxu0 0
        %1719 = vmatprep.subr.bf16.mxu0 0
        %1720 = vmatpush1.bf16.msra.mxu0 0
        %1721 = vmatprep.subr.bf16.mxu0 0
        %1722 = vmatpush1.bf16.msra.mxu0 0
        %1723 = vmatprep.subr.bf16.mxu0 0
        %1724 = vmatpush1.bf16.msra.mxu0 0
        %1725 = vmatprep.subr.bf16.mxu0 0
        %1726 = vmatpush1.bf16.msra.mxu0 0
        %1727 = vmatprep.mubr.bf16.mxu0 0
        %1728 = vmatmul.mubr.bf16.gmra.mrb[0].mxu0 %v1684
        %v1729 = vpop.f32.mrb[0].mxu0
        %v1730 = vadd.f32 %v1625, %v1729
        %v1731 = vpop.f32.mrb[0].mxu0
        %v1732 = vadd.f32 %v1625, %v1731
        %v1733 = vpop.f32.mrb[0].mxu0
        %v1734 = vadd.f32 %v1630, %v1733
        %v1735 = vpop.f32.mrb[0].mxu0
        %v1736 = vadd.f32 %v1630, %v1735
        %1737 = vmatprep.mubr.bf16.mxu0 0
        %1738 = vmatmul.mubr.bf16.gmra.mrb[0].mxu0 %v1687
        %v1739 = vpop.f32.mrb[0].mxu0
        %v1740 = vadd.f32 %v1635, %v1739
        %v1741 = vpop.f32.mrb[0].mxu0
        %v1742 = vadd.f32 %v1635, %v1741
        %v1743 = vpop.f32.mrb[0].mxu0
        %v1744 = vadd.f32 %v1640, %v1743
        %v1745 = vpop.f32.mrb[0].mxu0
        %v1746 = vadd.f32 %v1640, %v1745
        %1747 = vmatprep.mubr.bf16.mxu0 0
        %1748 = vmatmul.mubr.bf16.gmra.mrb[0].mxu0 %v1690
        %v1749 = vpop.f32.mrb[0].mxu0
        %v1750 = vadd.f32 %v1645, %v1749
        %v1751 = vpop.f32.mrb[0].mxu0
        %v1752 = vadd.f32 %v1645, %v1751
        %v1753 = vpop.f32.mrb[0].mxu0
        %v1754 = vadd.f32 %v1650, %v1753
        %v1755 = vpop.f32.mrb[0].mxu0
        %v1756 = vadd.f32 %v1650, %v1755
        %1757 = vmatprep.mubr.bf16.mxu0 0
        %1758 = vmatmul.mubr.bf16.gmra.mrb[0].mxu0 %v1693
        %v1759 = vpop.f32.mrb[0].mxu0
        %v1760 = vadd.f32 %v1655, %v1759
        %v1761 = vpop.f32.mrb[0].mxu0
        %v1762 = vadd.f32 %v1655, %v1761
        %v1763 = vpop.f32.mrb[0].mxu0
        %v1764 = vadd.f32 %v1660, %v1763
        %v1765 = vpop.f32.mrb[0].mxu0
        %v1766 = vadd.f32 %v1660, %v1765
        %1767 = vdwg.mxu0
        %1768 = vmatprep.subr.bf16.mxu0 %v1593
        %1769 = vmatpush1.bf16.msra.mxu0 %v1592
        %1770 = vmatprep.subr.bf16.mxu0 %v1609
        %1771 = vmatpush1.bf16.msra.mxu0 %v1608
        %1772 = vmatprep.subr.bf16.mxu0 0
        %1773 = vmatpush1.bf16.msra.mxu0 0
        %1774 = vmatprep.subr.bf16.mxu0 0
        %1775 = vmatpush1.bf16.msra.mxu0 0
        %1776 = vmatprep.subr.bf16.mxu0 0
        %1777 = vmatpush1.bf16.msra.mxu0 0
        %1778 = vmatprep.subr.bf16.mxu0 0
        %1779 = vmatpush1.bf16.msra.mxu0 0
        %1780 = vmatprep.subr.bf16.mxu0 0
        %1781 = vmatpush1.bf16.msra.mxu0 0
        %1782 = vmatprep.subr.bf16.mxu0 0
        %1783 = vmatpush1.bf16.msra.mxu0 0
        %1784 = vmatprep.subr.bf16.mxu0 0
        %1785 = vmatpush1.bf16.msra.mxu0 0
        %1786 = vmatprep.subr.bf16.mxu0 0
        %1787 = vmatpush1.bf16.msra.mxu0 0
        %1788 = vmatprep.subr.bf16.mxu0 0
        %1789 = vmatpush1.bf16.msra.mxu0 0
        %1790 = vmatprep.subr.bf16.mxu0 0
        %1791 = vmatpush1.bf16.msra.mxu0 0
        %1792 = vmatprep.subr.bf16.mxu0 0
        %1793 = vmatpush1.bf16.msra.mxu0 0
        %1794 = vmatprep.subr.bf16.mxu0 0
        %1795 = vmatpush1.bf16.msra.mxu0 0
        %1796 = vmatprep.subr.bf16.mxu0 0
        %1797 = vmatpush1.bf16.msra.mxu0 0
        %1798 = vmatprep.subr.bf16.mxu0 0
        %1799 = vmatpush1.bf16.msra.mxu0 0
        %1800 = vmatprep.mubr.bf16.mxu0 0
        %1801 = vmatmul.mubr.bf16.gmra.mrb[0].mxu0 %v1684
        %v1802 = vpop.f32.mrb[0].mxu0
        %v1803 = vadd.f32 %v1625, %v1802
        %v1804 = vpop.f32.mrb[0].mxu0
        %v1805 = vadd.f32 %v1625, %v1804
        %v1806 = vpop.f32.mrb[0].mxu0
        %v1807 = vadd.f32 %v1630, %v1806
        %v1808 = vpop.f32.mrb[0].mxu0
        %v1809 = vadd.f32 %v1630, %v1808
        %1810 = vmatprep.mubr.bf16.mxu0 0
        %1811 = vmatmul.mubr.bf16.gmra.mrb[0].mxu0 %v1687
        %v1812 = vpop.f32.mrb[0].mxu0
        %v1813 = vadd.f32 %v1635, %v1812
        %v1814 = vpop.f32.mrb[0].mxu0
        %v1815 = vadd.f32 %v1635, %v1814
        %v1816 = vpop.f32.mrb[0].mxu0
        %v1817 = vadd.f32 %v1640, %v1816
        %v1818 = vpop.f32.mrb[0].mxu0
        %v1819 = vadd.f32 %v1640, %v1818
        %1820 = vmatprep.mubr.bf16.mxu0 0
        %1821 = vmatmul.mubr.bf16.gmra.mrb[0].mxu0 %v1690
        %v1822 = vpop.f32.mrb[0].mxu0
        %v1823 = vadd.f32 %v1645, %v1822
        %v1824 = vpop.f32.mrb[0].mxu0
        %v1825 = vadd.f32 %v1645, %v1824
        %v1826 = vpop.f32.mrb[0].mxu0
        %v1827 = vadd.f32 %v1650, %v1826
        %v1828 = vpop.f32.mrb[0].mxu0
        %v1829 = vadd.f32 %v1650, %v1828
        %1830 = vmatprep.mubr.bf16.mxu0 0
        %1831 = vmatmul.mubr.bf16.gmra.mrb[0].mxu0 %v1693
        %v1832 = vpop.f32.mrb[0].mxu0
        %v1833 = vadd.f32 %v1655, %v1832
        %v1834 = vpop.f32.mrb[0].mxu0
        %v1835 = vadd.f32 %v1655, %v1834
        %v1836 = vpop.f32.mrb[0].mxu0
        %v1837 = vadd.f32 %v1660, %v1836
        %v1838 = vpop.f32.mrb[0].mxu0
        %v1839 = vadd.f32 %v1660, %v1838
        %1840 = vdwg.mxu0
        %1841 = vmatprep.subr.bf16.mxu0 %v1595
        %1842 = vmatpush1.bf16.msra.mxu0 %v1594
        %1843 = vmatprep.subr.bf16.mxu0 %v1611
        %1844 = vmatpush1.bf16.msra.mxu0 %v1610
        %1845 = vmatprep.subr.bf16.mxu0 0
        %1846 = vmatpush1.bf16.msra.mxu0 0
        %1847 = vmatprep.subr.bf16.mxu0 0
        %1848 = vmatpush1.bf16.msra.mxu0 0
        %1849 = vmatprep.subr.bf16.mxu0 0
        %1850 = vmatpush1.bf16.msra.mxu0 0
        %1851 = vmatprep.subr.bf16.mxu0 0
        %1852 = vmatpush1.bf16.msra.mxu0 0
        %1853 = vmatprep.subr.bf16.mxu0 0
        %1854 = vmatpush1.bf16.msra.mxu0 0
        %1855 = vmatprep.subr.bf16.mxu0 0
        %1856 = vmatpush1.bf16.msra.mxu0 0
        %1857 = vmatprep.subr.bf16.mxu0 0
        %1858 = vmatpush1.bf16.msra.mxu0 0
        %1859 = vmatprep.subr.bf16.mxu0 0
        %1860 = vmatpush1.bf16.msra.mxu0 0
        %1861 = vmatprep.subr.bf16.mxu0 0
        %1862 = vmatpush1.bf16.msra.mxu0 0
        %1863 = vmatprep.subr.bf16.mxu0 0
        %1864 = vmatpush1.bf16.msra.mxu0 0
        %1865 = vmatprep.subr.bf16.mxu0 0
        %1866 = vmatpush1.bf16.msra.mxu0 0
        %1867 = vmatprep.subr.bf16.mxu0 0
        %1868 = vmatpush1.bf16.msra.mxu0 0
        %1869 = vmatprep.subr.bf16.mxu0 0
        %1870 = vmatpush1.bf16.msra.mxu0 0
        %1871 = vmatprep.subr.bf16.mxu0 0
        %1872 = vmatpush1.bf16.msra.mxu0 0
        %1873 = vmatprep.mubr.bf16.mxu0 0
        %1874 = vmatmul.mubr.bf16.gmra.mrb[0].mxu0 %v1684
        %v1875 = vpop.f32.mrb[0].mxu0
        %v1876 = vadd.f32 %v1625, %v1875
        %v1877 = vpop.f32.mrb[0].mxu0
        %v1878 = vadd.f32 %v1625, %v1877
        %v1879 = vpop.f32.mrb[0].mxu0
        %v1880 = vadd.f32 %v1630, %v1879
        %v1881 = vpop.f32.mrb[0].mxu0
        %v1882 = vadd.f32 %v1630, %v1881
        %1883 = vmatprep.mubr.bf16.mxu0 0
        %1884 = vmatmul.mubr.bf16.gmra.mrb[0].mxu0 %v1687
        %v1885 = vpop.f32.mrb[0].mxu0
        %v1886 = vadd.f32 %v1635, %v1885
        %v1887 = vpop.f32.mrb[0].mxu0
        %v1888 = vadd.f32 %v1635, %v1887
        %v1889 = vpop.f32.mrb[0].mxu0
        %v1890 = vadd.f32 %v1640, %v1889
        %v1891 = vpop.f32.mrb[0].mxu0
        %v1892 = vadd.f32 %v1640, %v1891
        %1893 = vmatprep.mubr.bf16.mxu0 0
        %1894 = vmatmul.mubr.bf16.gmra.mrb[0].mxu0 %v1690
        %v1895 = vpop.f32.mrb[0].mxu0
        %v1896 = vadd.f32 %v1645, %v1895
        %v1897 = vpop.f32.mrb[0].mxu0
        %v1898 = vadd.f32 %v1645, %v1897
        %v1899 = vpop.f32.mrb[0].mxu0
        %v1900 = vadd.f32 %v1650, %v1899
        %v1901 = vpop.f32.mrb[0].mxu0
        %v1902 = vadd.f32 %v1650, %v1901
        %1903 = vmatprep.mubr.bf16.mxu0 0
        %1904 = vmatmul.mubr.bf16.gmra.mrb[0].mxu0 %v1693
        %v1905 = vpop.f32.mrb[0].mxu0
        %v1906 = vadd.f32 %v1655, %v1905
        %v1907 = vpop.f32.mrb[0].mxu0
        %v1908 = vadd.f32 %v1655, %v1907
        %v1909 = vpop.f32.mrb[0].mxu0
        %v1910 = vadd.f32 %v1660, %v1909
        %v1911 = vpop.f32.mrb[0].mxu0
        %v1912 = vadd.f32 %v1660, %v1911
        %1913 = vdwg.mxu0
        %1914 = vmatprep.subr.bf16.mxu0 %v1597
        %1915 = vmatpush1.bf16.msra.mxu0 %v1596
        %1916 = vmatprep.subr.bf16.mxu0 %v1613
        %1917 = vmatpush1.bf16.msra.mxu0 %v1612
        %1918 = vmatprep.subr.bf16.mxu0 0
        %1919 = vmatpush1.bf16.msra.mxu0 0
        %1920 = vmatprep.subr.bf16.mxu0 0
        %1921 = vmatpush1.bf16.msra.mxu0 0
        %1922 = vmatprep.subr.bf16.mxu0 0
        %1923 = vmatpush1.bf16.msra.mxu0 0
        %1924 = vmatprep.subr.bf16.mxu0 0
        %1925 = vmatpush1.bf16.msra.mxu0 0
        %1926 = vmatprep.subr.bf16.mxu0 0
        %1927 = vmatpush1.bf16.msra.mxu0 0
        %1928 = vmatprep.subr.bf16.mxu0 0
        %1929 = vmatpush1.bf16.msra.mxu0 0
        %1930 = vmatprep.subr.bf16.mxu0 0
        %1931 = vmatpush1.bf16.msra.mxu0 0
        %1932 = vmatprep.subr.bf16.mxu0 0
        %1933 = vmatpush1.bf16.msra.mxu0 0
        %1934 = vmatprep.subr.bf16.mxu0 0
        %1935 = vmatpush1.bf16.msra.mxu0 0
        %1936 = vmatprep.subr.bf16.mxu0 0
        %1937 = vmatpush1.bf16.msra.mxu0 0
        %1938 = vmatprep.subr.bf16.mxu0 0
        %1939 = vmatpush1.bf16.msra.mxu0 0
        %1940 = vmatprep.subr.bf16.mxu0 0
        %1941 = vmatpush1.bf16.msra.mxu0 0
        %1942 = vmatprep.subr.bf16.mxu0 0
        %1943 = vmatpush1.bf16.msra.mxu0 0
        %1944 = vmatprep.subr.bf16.mxu0 0
        %1945 = vmatpush1.bf16.msra.mxu0 0
        %1946 = vmatprep.mubr.bf16.mxu0 0
        %1947 = vmatmul.mubr.bf16.gmra.mrb[0].mxu0 %v1684
        %v1948 = vpop.f32.mrb[0].mxu0
        %v1949 = vadd.f32 %v1625, %v1948
        %v1950 = vpop.f32.mrb[0].mxu0
        %v1951 = vadd.f32 %v1625, %v1950
        %v1952 = vpop.f32.mrb[0].mxu0
        %v1953 = vadd.f32 %v1630, %v1952
        %v1954 = vpop.f32.mrb[0].mxu0
        %v1955 = vadd.f32 %v1630, %v1954
        %1956 = vmatprep.mubr.bf16.mxu0 0
        %1957 = vmatmul.mubr.bf16.gmra.mrb[0].mxu0 %v1687
        %v1958 = vpop.f32.mrb[0].mxu0
        %v1959 = vadd.f32 %v1635, %v1958
        %v1960 = vpop.f32.mrb[0].mxu0
        %v1961 = vadd.f32 %v1635, %v1960
        %v1962 = vpop.f32.mrb[0].mxu0
        %v1963 = vadd.f32 %v1640, %v1962
        %v1964 = vpop.f32.mrb[0].mxu0
        %v1965 = vadd.f32 %v1640, %v1964
        %1966 = vmatprep.mubr.bf16.mxu0 0
        %1967 = vmatmul.mubr.bf16.gmra.mrb[0].mxu0 %v1690
        %v1968 = vpop.f32.mrb[0].mxu0
        %v1969 = vadd.f32 %v1645, %v1968
        %v1970 = vpop.f32.mrb[0].mxu0
        %v1971 = vadd.f32 %v1645, %v1970
        %v1972 = vpop.f32.mrb[0].mxu0
        %v1973 = vadd.f32 %v1650, %v1972
        %v1974 = vpop.f32.mrb[0].mxu0
        %v1975 = vadd.f32 %v1650, %v1974
        %1976 = vmatprep.mubr.bf16.mxu0 0
        %1977 = vmatmul.mubr.bf16.gmra.mrb[0].mxu0 %v1693
        %v1978 = vpop.f32.mrb[0].mxu0
        %v1979 = vadd.f32 %v1655, %v1978
        %v1980 = vpop.f32.mrb[0].mxu0
        %v1981 = vadd.f32 %v1655, %v1980
        %v1982 = vpop.f32.mrb[0].mxu0
        %v1983 = vadd.f32 %v1660, %v1982
        %v1984 = vpop.f32.mrb[0].mxu0
        %v1985 = vadd.f32 %v1660, %v1984
        %1986 = vdwg.mxu0
        %1987 = vmatprep.subr.bf16.mxu0 %v1599
        %1988 = vmatpush1.bf16.msra.mxu0 %v1598
        %1989 = vmatprep.subr.bf16.mxu0 %v1615
        %1990 = vmatpush1.bf16.msra.mxu0 %v1614
        %1991 = vmatprep.subr.bf16.mxu0 0
        %1992 = vmatpush1.bf16.msra.mxu0 0
        %1993 = vmatprep.subr.bf16.mxu0 0
        %1994 = vmatpush1.bf16.msra.mxu0 0
        %1995 = vmatprep.subr.bf16.mxu0 0
        %1996 = vmatpush1.bf16.msra.mxu0 0
        %1997 = vmatprep.subr.bf16.mxu0 0
        %1998 = vmatpush1.bf16.msra.mxu0 0
        %1999 = vmatprep.subr.bf16.mxu0 0
        %2000 = vmatpush1.bf16.msra.mxu0 0
        %2001 = vmatprep.subr.bf16.mxu0 0
        %2002 = vmatpush1.bf16.msra.mxu0 0
        %2003 = vmatprep.subr.bf16.mxu0 0
        %2004 = vmatpush1.bf16.msra.mxu0 0
        %2005 = vmatprep.subr.bf16.mxu0 0
        %2006 = vmatpush1.bf16.msra.mxu0 0
        %2007 = vmatprep.subr.bf16.mxu0 0
        %2008 = vmatpush1.bf16.msra.mxu0 0
        %2009 = vmatprep.subr.bf16.mxu0 0
        %2010 = vmatpush1.bf16.msra.mxu0 0
        %2011 = vmatprep.subr.bf16.mxu0 0
        %2012 = vmatpush1.bf16.msra.mxu0 0
        %2013 = vmatprep.subr.bf16.mxu0 0
        %2014 = vmatpush1.bf16.msra.mxu0 0
        %2015 = vmatprep.subr.bf16.mxu0 0
        %2016 = vmatpush1.bf16.msra.mxu0 0
        %2017 = vmatprep.subr.bf16.mxu0 0
        %2018 = vmatpush1.bf16.msra.mxu0 0
        %2019 = vmatprep.mubr.bf16.mxu0 0
        %2020 = vmatmul.mubr.bf16.gmra.mrb[0].mxu0 %v1684
        %v2021 = vpop.f32.mrb[0].mxu0
        %v2022 = vadd.f32 %v1625, %v2021
        %v2023 = vpop.f32.mrb[0].mxu0
        %v2024 = vadd.f32 %v1625, %v2023
        %v2025 = vpop.f32.mrb[0].mxu0
        %v2026 = vadd.f32 %v1630, %v2025
        %v2027 = vpop.f32.mrb[0].mxu0
        %v2028 = vadd.f32 %v1630, %v2027
        %2029 = vmatprep.mubr.bf16.mxu0 0
        %2030 = vmatmul.mubr.bf16.gmra.mrb[0].mxu0 %v1687
        %v2031 = vpop.f32.mrb[0].mxu0
        %v2032 = vadd.f32 %v1635, %v2031
        %v2033 = vpop.f32.mrb[0].mxu0
        %v2034 = vadd.f32 %v1635, %v2033
        %v2035 = vpop.f32.mrb[0].mxu0
        %v2036 = vadd.f32 %v1640, %v2035
        %v2037 = vpop.f32.mrb[0].mxu0
        %v2038 = vadd.f32 %v1640, %v2037
        %2039 = vmatprep.mubr.bf16.mxu0 0
        %2040 = vmatmul.mubr.bf16.gmra.mrb[0].mxu0 %v1690
        %v2041 = vpop.f32.mrb[0].mxu0
        %v2042 = vadd.f32 %v1645, %v2041
        %v2043 = vpop.f32.mrb[0].mxu0
        %v2044 = vadd.f32 %v1645, %v2043
        %v2045 = vpop.f32.mrb[0].mxu0
        %v2046 = vadd.f32 %v1650, %v2045
        %v2047 = vpop.f32.mrb[0].mxu0
        %v2048 = vadd.f32 %v1650, %v2047
        %2049 = vmatprep.mubr.bf16.mxu0 0
        %2050 = vmatmul.mubr.bf16.gmra.mrb[0].mxu0 %v1693
        %v2051 = vpop.f32.mrb[0].mxu0
        %v2052 = vadd.f32 %v1655, %v2051
        %v2053 = vpop.f32.mrb[0].mxu0
        %v2054 = vadd.f32 %v1655, %v2053
        %v2055 = vpop.f32.mrb[0].mxu0
        %v2056 = vadd.f32 %v1660, %v2055
        %v2057 = vpop.f32.mrb[0].mxu0
        %v2058 = vadd.f32 %v1660, %v2057
        %2059 = vdwg.mxu0
        %2060 = vmatprep.subr.bf16.mxu0 %v1601
        %2061 = vmatpush1.bf16.msra.mxu0 %v1600
        %2062 = vmatprep.subr.bf16.mxu0 %v1617
        %2063 = vmatpush1.bf16.msra.mxu0 %v1616
        %2064 = vmatprep.subr.bf16.mxu0 0
        %2065 = vmatpush1.bf16.msra.mxu0 0
        %2066 = vmatprep.subr.bf16.mxu0 0
        %2067 = vmatpush1.bf16.msra.mxu0 0
        %2068 = vmatprep.subr.bf16.mxu0 0
        %2069 = vmatpush1.bf16.msra.mxu0 0
        %2070 = vmatprep.subr.bf16.mxu0 0
        %2071 = vmatpush1.bf16.msra.mxu0 0
        %2072 = vmatprep.subr.bf16.mxu0 0
        %2073 = vmatpush1.bf16.msra.mxu0 0
        %2074 = vmatprep.subr.bf16.mxu0 0
        %2075 = vmatpush1.bf16.msra.mxu0 0
        %2076 = vmatprep.subr.bf16.mxu0 0
        %2077 = vmatpush1.bf16.msra.mxu0 0
        %2078 = vmatprep.subr.bf16.mxu0 0
        %2079 = vmatpush1.bf16.msra.mxu0 0
        %2080 = vmatprep.subr.bf16.mxu0 0
        %2081 = vmatpush1.bf16.msra.mxu0 0
        %2082 = vmatprep.subr.bf16.mxu0 0
        %2083 = vmatpush1.bf16.msra.mxu0 0
        %2084 = vmatprep.subr.bf16.mxu0 0
        %2085 = vmatpush1.bf16.msra.mxu0 0
        %2086 = vmatprep.subr.bf16.mxu0 0
        %2087 = vmatpush1.bf16.msra.mxu0 0
        %2088 = vmatprep.subr.bf16.mxu0 0
        %2089 = vmatpush1.bf16.msra.mxu0 0
        %2090 = vmatprep.subr.bf16.mxu0 0
        %2091 = vmatpush1.bf16.msra.mxu0 0
        %2092 = vmatprep.mubr.bf16.mxu0 0
        %2093 = vmatmul.mubr.bf16.gmra.mrb[0].mxu0 %v1684
        %v2094 = vpop.f32.mrb[0].mxu0
        %v2095 = vadd.f32 %v1625, %v2094
        %v2096 = vpop.f32.mrb[0].mxu0
        %v2097 = vadd.f32 %v1625, %v2096
        %v2098 = vpop.f32.mrb[0].mxu0
        %v2099 = vadd.f32 %v1630, %v2098
        %v2100 = vpop.f32.mrb[0].mxu0
        %v2101 = vadd.f32 %v1630, %v2100
        %2102 = vmatprep.mubr.bf16.mxu0 0
        %2103 = vmatmul.mubr.bf16.gmra.mrb[0].mxu0 %v1687
        %v2104 = vpop.f32.mrb[0].mxu0
        %v2105 = vadd.f32 %v1635, %v2104
        %v2106 = vpop.f32.mrb[0].mxu0
        %v2107 = vadd.f32 %v1635, %v2106
        %v2108 = vpop.f32.mrb[0].mxu0
        %v2109 = vadd.f32 %v1640, %v2108
        %v2110 = vpop.f32.mrb[0].mxu0
        %v2111 = vadd.f32 %v1640, %v2110
        %2112 = vmatprep.mubr.bf16.mxu0 0
        %2113 = vmatmul.mubr.bf16.gmra.mrb[0].mxu0 %v1690
        %v2114 = vpop.f32.mrb[0].mxu0
        %v2115 = vadd.f32 %v1645, %v2114
        %v2116 = vpop.f32.mrb[0].mxu0
        %v2117 = vadd.f32 %v1645, %v2116
        %v2118 = vpop.f32.mrb[0].mxu0
        %v2119 = vadd.f32 %v1650, %v2118
        %v2120 = vpop.f32.mrb[0].mxu0
        %v2121 = vadd.f32 %v1650, %v2120
        %2122 = vmatprep.mubr.bf16.mxu0 0
        %2123 = vmatmul.mubr.bf16.gmra.mrb[0].mxu0 %v1693
        %v2124 = vpop.f32.mrb[0].mxu0
        %v2125 = vadd.f32 %v1655, %v2124
        %v2126 = vpop.f32.mrb[0].mxu0
        %v2127 = vadd.f32 %v1655, %v2126
        %v2128 = vpop.f32.mrb[0].mxu0
        %v2129 = vadd.f32 %v1660, %v2128
        %v2130 = vpop.f32.mrb[0].mxu0
        %v2131 = vadd.f32 %v1660, %v2130
        %2132 = vdwg.mxu0
        %2133 = vmatprep.subr.bf16.mxu0 %v1603
        %2134 = vmatpush1.bf16.msra.mxu0 %v1602
        %2135 = vmatprep.subr.bf16.mxu0 %v1619
        %2136 = vmatpush1.bf16.msra.mxu0 %v1618
        %2137 = vmatprep.subr.bf16.mxu0 0
        %2138 = vmatpush1.bf16.msra.mxu0 0
        %2139 = vmatprep.subr.bf16.mxu0 0
        %2140 = vmatpush1.bf16.msra.mxu0 0
        %2141 = vmatprep.subr.bf16.mxu0 0
        %2142 = vmatpush1.bf16.msra.mxu0 0
        %2143 = vmatprep.subr.bf16.mxu0 0
        %2144 = vmatpush1.bf16.msra.mxu0 0
        %2145 = vmatprep.subr.bf16.mxu0 0
        %2146 = vmatpush1.bf16.msra.mxu0 0
        %2147 = vmatprep.subr.bf16.mxu0 0
        %2148 = vmatpush1.bf16.msra.mxu0 0
        %2149 = vmatprep.subr.bf16.mxu0 0
        %2150 = vmatpush1.bf16.msra.mxu0 0
        %2151 = vmatprep.subr.bf16.mxu0 0
        %2152 = vmatpush1.bf16.msra.mxu0 0
        %2153 = vmatprep.subr.bf16.mxu0 0
        %2154 = vmatpush1.bf16.msra.mxu0 0
        %2155 = vmatprep.subr.bf16.mxu0 0
        %2156 = vmatpush1.bf16.msra.mxu0 0
        %2157 = vmatprep.subr.bf16.mxu0 0
        %2158 = vmatpush1.bf16.msra.mxu0 0
        %2159 = vmatprep.subr.bf16.mxu0 0
        %2160 = vmatpush1.bf16.msra.mxu0 0
        %2161 = vmatprep.subr.bf16.mxu0 0
        %2162 = vmatpush1.bf16.msra.mxu0 0
        %2163 = vmatprep.subr.bf16.mxu0 0
        %2164 = vmatpush1.bf16.msra.mxu0 0
        %2165 = vmatprep.mubr.bf16.mxu0 0
        %2166 = vmatmul.mubr.bf16.gmra.mrb[0].mxu0 %v1684
        %v2167 = vpop.f32.mrb[0].mxu0
        %v2168 = vadd.f32 %v1625, %v2167
        %v2169 = vpop.f32.mrb[0].mxu0
        %v2170 = vadd.f32 %v1625, %v2169
        %v2171 = vpop.f32.mrb[0].mxu0
        %v2172 = vadd.f32 %v1630, %v2171
        %v2173 = vpop.f32.mrb[0].mxu0
        %v2174 = vadd.f32 %v1630, %v2173
        %2175 = vmatprep.mubr.bf16.mxu0 0
        %2176 = vmatmul.mubr.bf16.gmra.mrb[0].mxu0 %v1687
        %v2177 = vpop.f32.mrb[0].mxu0
        %v2178 = vadd.f32 %v1635, %v2177
        %v2179 = vpop.f32.mrb[0].mxu0
        %v2180 = vadd.f32 %v1635, %v2179
        %v2181 = vpop.f32.mrb[0].mxu0
        %v2182 = vadd.f32 %v1640, %v2181
        %v2183 = vpop.f32.mrb[0].mxu0
        %v2184 = vadd.f32 %v1640, %v2183
        %2185 = vmatprep.mubr.bf16.mxu0 0
        %2186 = vmatmul.mubr.bf16.gmra.mrb[0].mxu0 %v1690
        %v2187 = vpop.f32.mrb[0].mxu0
        %v2188 = vadd.f32 %v1645, %v2187
        %v2189 = vpop.f32.mrb[0].mxu0
        %v2190 = vadd.f32 %v1645, %v2189
        %v2191 = vpop.f32.mrb[0].mxu0
        %v2192 = vadd.f32 %v1650, %v2191
        %v2193 = vpop.f32.mrb[0].mxu0
        %v2194 = vadd.f32 %v1650, %v2193
        %2195 = vmatprep.mubr.bf16.mxu0 0
        %2196 = vmatmul.mubr.bf16.gmra.mrb[0].mxu0 %v1693
        %v2197 = vpop.f32.mrb[0].mxu0
        %v2198 = vadd.f32 %v1655, %v2197
        %v2199 = vpop.f32.mrb[0].mxu0
        %v2200 = vadd.f32 %v1655, %v2199
        %v2201 = vpop.f32.mrb[0].mxu0
        %v2202 = vadd.f32 %v1660, %v2201
        %v2203 = vpop.f32.mrb[0].mxu0
        %v2204 = vadd.f32 %v1660, %v2203
        %2205 = vdwg.mxu0
        %2206 = vmatprep.subr.bf16.mxu0 %v1605
        %2207 = vmatpush1.bf16.msra.mxu0 %v1604
        %2208 = vmatprep.subr.bf16.mxu0 %v1621
        %2209 = vmatpush1.bf16.msra.mxu0 %v1620
        %2210 = vmatprep.subr.bf16.mxu0 0
        %2211 = vmatpush1.bf16.msra.mxu0 0
        %2212 = vmatprep.subr.bf16.mxu0 0
        %2213 = vmatpush1.bf16.msra.mxu0 0
        %2214 = vmatprep.subr.bf16.mxu0 0
        %2215 = vmatpush1.bf16.msra.mxu0 0
        %2216 = vmatprep.subr.bf16.mxu0 0
        %2217 = vmatpush1.bf16.msra.mxu0 0
        %2218 = vmatprep.subr.bf16.mxu0 0
        %2219 = vmatpush1.bf16.msra.mxu0 0
        %2220 = vmatprep.subr.bf16.mxu0 0
        %2221 = vmatpush1.bf16.msra.mxu0 0
        %2222 = vmatprep.subr.bf16.mxu0 0
        %2223 = vmatpush1.bf16.msra.mxu0 0
        %2224 = vmatprep.subr.bf16.mxu0 0
        %2225 = vmatpush1.bf16.msra.mxu0 0
        %2226 = vmatprep.subr.bf16.mxu0 0
        %2227 = vmatpush1.bf16.msra.mxu0 0
        %2228 = vmatprep.subr.bf16.mxu0 0
        %2229 = vmatpush1.bf16.msra.mxu0 0
        %2230 = vmatprep.subr.bf16.mxu0 0
        %2231 = vmatpush1.bf16.msra.mxu0 0
        %2232 = vmatprep.subr.bf16.mxu0 0
        %2233 = vmatpush1.bf16.msra.mxu0 0
        %2234 = vmatprep.subr.bf16.mxu0 0
        %2235 = vmatpush1.bf16.msra.mxu0 0
        %2236 = vmatprep.subr.bf16.mxu0 0
        %2237 = vmatpush1.bf16.msra.mxu0 0
        %2238 = vmatprep.mubr.bf16.mxu0 0
        %2239 = vmatmul.mubr.bf16.gmra.mrb[0].mxu0 %v1684
        %v2240 = vpop.f32.mrb[0].mxu0
        %v2241 = vadd.f32 %v1625, %v2240
        %v2242 = vpop.f32.mrb[0].mxu0
        %v2243 = vadd.f32 %v1625, %v2242
        %v2244 = vpop.f32.mrb[0].mxu0
        %v2245 = vadd.f32 %v1630, %v2244
        %v2246 = vpop.f32.mrb[0].mxu0
        %v2247 = vadd.f32 %v1630, %v2246
        %2248 = vmatprep.mubr.bf16.mxu0 0
        %2249 = vmatmul.mubr.bf16.gmra.mrb[0].mxu0 %v1687
        %v2250 = vpop.f32.mrb[0].mxu0
        %v2251 = vadd.f32 %v1635, %v2250
        %v2252 = vpop.f32.mrb[0].mxu0
        %v2253 = vadd.f32 %v1635, %v2252
        %v2254 = vpop.f32.mrb[0].mxu0
        %v2255 = vadd.f32 %v1640, %v2254
        %v2256 = vpop.f32.mrb[0].mxu0
        %v2257 = vadd.f32 %v1640, %v2256
        %2258 = vmatprep.mubr.bf16.mxu0 0
        %2259 = vmatmul.mubr.bf16.gmra.mrb[0].mxu0 %v1690
        %v2260 = vpop.f32.mrb[0].mxu0
        %v2261 = vadd.f32 %v1645, %v2260
        %v2262 = vpop.f32.mrb[0].mxu0
        %v2263 = vadd.f32 %v1645, %v2262
        %v2264 = vpop.f32.mrb[0].mxu0
        %v2265 = vadd.f32 %v1650, %v2264
        %v2266 = vpop.f32.mrb[0].mxu0
        %v2267 = vadd.f32 %v1650, %v2266
        %2268 = vmatprep.mubr.bf16.mxu0 0
        %2269 = vmatmul.mubr.bf16.gmra.mrb[0].mxu0 %v1693
        %v2270 = vpop.f32.mrb[0].mxu0
        %v2271 = vadd.f32 %v1655, %v2270
        %v2272 = vpop.f32.mrb[0].mxu0
        %v2273 = vadd.f32 %v1655, %v2272
        %v2274 = vpop.f32.mrb[0].mxu0
        %v2275 = vadd.f32 %v1660, %v2274
        %v2276 = vpop.f32.mrb[0].mxu0
        %v2277 = vadd.f32 %v1660, %v2276
        %2278 = vdwg.mxu0
        %v2279 = vmax.f32 %v1730, 0.0
        %v2280 = vmax.f32 %v1732, 0.0
        %v2281 = vmax.f32 %v1803, 0.0
        %v2282 = vmax.f32 %v1805, 0.0
        %v2283 = vmax.f32 %v1876, 0.0
        %v2284 = vmax.f32 %v1878, 0.0
        %v2285 = vmax.f32 %v1949, 0.0
        %v2286 = vmax.f32 %v1951, 0.0
        %v2287 = vmax.f32 %v2022, 0.0
        %v2288 = vmax.f32 %v2024, 0.0
        %v2289 = vmax.f32 %v2095, 0.0
        %v2290 = vmax.f32 %v2097, 0.0
        %v2291 = vmax.f32 %v2168, 0.0
        %v2292 = vmax.f32 %v2170, 0.0
        %v2293 = vmax.f32 %v2241, 0.0
        %v2294 = vmax.f32 %v2243, 0.0
        %v2295 = vmax.f32 %v1734, 0.0
        %v2296 = vmax.f32 %v1736, 0.0
        %v2297 = vmax.f32 %v1807, 0.0
        %v2298 = vmax.f32 %v1809, 0.0
        %v2299 = vmax.f32 %v1880, 0.0
        %v2300 = vmax.f32 %v1882, 0.0
        %v2301 = vmax.f32 %v1953, 0.0
        %v2302 = vmax.f32 %v1955, 0.0
        %v2303 = vmax.f32 %v2026, 0.0
        %v2304 = vmax.f32 %v2028, 0.0
        %v2305 = vmax.f32 %v2099, 0.0
        %v2306 = vmax.f32 %v2101, 0.0
        %v2307 = vmax.f32 %v2172, 0.0
        %v2308 = vmax.f32 %v2174, 0.0
        %v2309 = vmax.f32 %v2245, 0.0
        %v2310 = vmax.f32 %v2247, 0.0
        %v2311 = vmax.f32 %v1740, 0.0
        %v2312 = vmax.f32 %v1742, 0.0
        %v2313 = vmax.f32 %v1813, 0.0
        %v2314 = vmax.f32 %v1815, 0.0
        %v2315 = vmax.f32 %v1886, 0.0
        %v2316 = vmax.f32 %v1888, 0.0
        %v2317 = vmax.f32 %v1959, 0.0
        %v2318 = vmax.f32 %v1961, 0.0
        %v2319 = vmax.f32 %v2032, 0.0
        %v2320 = vmax.f32 %v2034, 0.0
        %v2321 = vmax.f32 %v2105, 0.0
        %v2322 = vmax.f32 %v2107, 0.0
        %v2323 = vmax.f32 %v2178, 0.0
        %v2324 = vmax.f32 %v2180, 0.0
        %v2325 = vmax.f32 %v2251, 0.0
        %v2326 = vmax.f32 %v2253, 0.0
        %v2327 = vmax.f32 %v1744, 0.0
        %v2328 = vmax.f32 %v1746, 0.0
        %v2329 = vmax.f32 %v1817, 0.0
        %v2330 = vmax.f32 %v1819, 0.0
        %v2331 = vmax.f32 %v1890, 0.0
        %v2332 = vmax.f32 %v1892, 0.0
        %v2333 = vmax.f32 %v1963, 0.0
        %v2334 = vmax.f32 %v1965, 0.0
        %v2335 = vmax.f32 %v2036, 0.0
        %v2336 = vmax.f32 %v2038, 0.0
        %v2337 = vmax.f32 %v2109, 0.0
        %v2338 = vmax.f32 %v2111, 0.0
        %v2339 = vmax.f32 %v2182, 0.0
        %v2340 = vmax.f32 %v2184, 0.0
        %v2341 = vmax.f32 %v2255, 0.0
        %v2342 = vmax.f32 %v2257, 0.0
        %v2343 = vmax.f32 %v1750, 0.0
        %v2344 = vmax.f32 %v1752, 0.0
        %v2345 = vmax.f32 %v1823, 0.0
        %v2346 = vmax.f32 %v1825, 0.0
        %v2347 = vmax.f32 %v1896, 0.0
        %v2348 = vmax.f32 %v1898, 0.0
        %v2349 = vmax.f32 %v1969, 0.0
        %v2350 = vmax.f32 %v1971, 0.0
        %v2351 = vmax.f32 %v2042, 0.0
        %v2352 = vmax.f32 %v2044, 0.0
        %v2353 = vmax.f32 %v2115, 0.0
        %v2354 = vmax.f32 %v2117, 0.0
        %v2355 = vmax.f32 %v2188, 0.0
        %v2356 = vmax.f32 %v2190, 0.0
        %v2357 = vmax.f32 %v2261, 0.0
        %v2358 = vmax.f32 %v2263, 0.0
        %v2359 = vmax.f32 %v1754, 0.0
        %v2360 = vmax.f32 %v1756, 0.0
        %v2361 = vmax.f32 %v1827, 0.0
        %v2362 = vmax.f32 %v1829, 0.0
        %v2363 = vmax.f32 %v1900, 0.0
        %v2364 = vmax.f32 %v1902, 0.0
        %v2365 = vmax.f32 %v1973, 0.0
        %v2366 = vmax.f32 %v1975, 0.0
        %v2367 = vmax.f32 %v2046, 0.0
        %v2368 = vmax.f32 %v2048, 0.0
        %v2369 = vmax.f32 %v2119, 0.0
        %v2370 = vmax.f32 %v2121, 0.0
        %v2371 = vmax.f32 %v2192, 0.0
        %v2372 = vmax.f32 %v2194, 0.0
        %v2373 = vmax.f32 %v2265, 0.0
        %v2374 = vmax.f32 %v2267, 0.0
        %v2375 = vmax.f32 %v1760, 0.0
        %v2376 = vmax.f32 %v1762, 0.0
        %v2377 = vmax.f32 %v1833, 0.0
        %v2378 = vmax.f32 %v1835, 0.0
        %v2379 = vmax.f32 %v1906, 0.0
        %v2380 = vmax.f32 %v1908, 0.0
        %v2381 = vmax.f32 %v1979, 0.0
        %v2382 = vmax.f32 %v1981, 0.0
        %v2383 = vmax.f32 %v2052, 0.0
        %v2384 = vmax.f32 %v2054, 0.0
        %v2385 = vmax.f32 %v2125, 0.0
        %v2386 = vmax.f32 %v2127, 0.0
        %v2387 = vmax.f32 %v2198, 0.0
        %v2388 = vmax.f32 %v2200, 0.0
        %v2389 = vmax.f32 %v2271, 0.0
        %v2390 = vmax.f32 %v2273, 0.0
        %v2391 = vmax.f32 %v1764, 0.0
        %v2392 = vmax.f32 %v1766, 0.0
        %v2393 = vmax.f32 %v1837, 0.0
        %v2394 = vmax.f32 %v1839, 0.0
        %v2395 = vmax.f32 %v1910, 0.0
        %v2396 = vmax.f32 %v1912, 0.0
        %v2397 = vmax.f32 %v1983, 0.0
        %v2398 = vmax.f32 %v1985, 0.0
        %v2399 = vmax.f32 %v2056, 0.0
        %v2400 = vmax.f32 %v2058, 0.0
        %v2401 = vmax.f32 %v2129, 0.0
        %v2402 = vmax.f32 %v2131, 0.0
        %v2403 = vmax.f32 %v2202, 0.0
        %v2404 = vmax.f32 %v2204, 0.0
        %v2405 = vmax.f32 %v2275, 0.0
        %v2406 = vmax.f32 %v2277, 0.0
        %v2407 = vmax.f32 %v2279, %v2280
        %v2408 = vmax.f32 %v2295, %v2296
        %v2409 = vmax.f32 %v2311, %v2312
        %v2410 = vmax.f32 %v2327, %v2328
        %v2411 = vmax.f32 %v2343, %v2344
        %v2412 = vmax.f32 %v2359, %v2360
        %v2413 = vmax.f32 %v2375, %v2376
        %v2414 = vmax.f32 %v2391, %v2392
        %v2415 = vmax.f32 %v2407, %v2281
        %v2416 = vmax.f32 %v2408, %v2297
        %v2417 = vmax.f32 %v2409, %v2313
        %v2418 = vmax.f32 %v2410, %v2329
        %v2419 = vmax.f32 %v2411, %v2345
        %v2420 = vmax.f32 %v2412, %v2361
        %v2421 = vmax.f32 %v2413, %v2377
        %v2422 = vmax.f32 %v2414, %v2393
        %v2423 = vmax.f32 %v2415, %v2282
        %v2424 = vmax.f32 %v2416, %v2298
        %v2425 = vmax.f32 %v2417, %v2314
        %v2426 = vmax.f32 %v2418, %v2330
        %v2427 = vmax.f32 %v2419, %v2346
        %v2428 = vmax.f32 %v2420, %v2362
        %v2429 = vmax.f32 %v2421, %v2378
        %v2430 = vmax.f32 %v2422, %v2394
        %v2431 = vmax.f32 %v2423, %v2283
        %v2432 = vmax.f32 %v2424, %v2299
        %v2433 = vmax.f32 %v2425, %v2315
        %v2434 = vmax.f32 %v2426, %v2331
        %v2435 = vmax.f32 %v2427, %v2347
        %v2436 = vmax.f32 %v2428, %v2363
        %v2437 = vmax.f32 %v2429, %v2379
        %v2438 = vmax.f32 %v2430, %v2395
        %v2439 = vmax.f32 %v2431, %v2284
        %v2440 = vmax.f32 %v2432, %v2300
        %v2441 = vmax.f32 %v2433, %v2316
        %v2442 = vmax.f32 %v2434, %v2332
        %v2443 = vmax.f32 %v2435, %v2348
        %v2444 = vmax.f32 %v2436, %v2364
        %v2445 = vmax.f32 %v2437, %v2380
        %v2446 = vmax.f32 %v2438, %v2396
        %v2447 = vmax.f32 %v2439, %v2285
        %v2448 = vmax.f32 %v2440, %v2301
        %v2449 = vmax.f32 %v2441, %v2317
        %v2450 = vmax.f32 %v2442, %v2333
        %v2451 = vmax.f32 %v2443, %v2349
        %v2452 = vmax.f32 %v2444, %v2365
        %v2453 = vmax.f32 %v2445, %v2381
        %v2454 = vmax.f32 %v2446, %v2397
        %v2455 = vmax.f32 %v2447, %v2286
        %v2456 = vmax.f32 %v2448, %v2302
        %v2457 = vmax.f32 %v2449, %v2318
        %v2458 = vmax.f32 %v2450, %v2334
        %v2459 = vmax.f32 %v2451, %v2350
        %v2460 = vmax.f32 %v2452, %v2366
        %v2461 = vmax.f32 %v2453, %v2382
        %v2462 = vmax.f32 %v2454, %v2398
        %v2463 = vmax.f32 %v2455, %v2287
        %v2464 = vmax.f32 %v2456, %v2303
        %v2465 = vmax.f32 %v2457, %v2319
        %v2466 = vmax.f32 %v2458, %v2335
        %v2467 = vmax.f32 %v2459, %v2351
        %v2468 = vmax.f32 %v2460, %v2367
        %v2469 = vmax.f32 %v2461, %v2383
        %v2470 = vmax.f32 %v2462, %v2399
        %v2471 = vmax.f32 %v2463, %v2288
        %v2472 = vmax.f32 %v2464, %v2304
        %v2473 = vmax.f32 %v2465, %v2320
        %v2474 = vmax.f32 %v2466, %v2336
        %v2475 = vmax.f32 %v2467, %v2352
        %v2476 = vmax.f32 %v2468, %v2368
        %v2477 = vmax.f32 %v2469, %v2384
        %v2478 = vmax.f32 %v2470, %v2400
        %v2479 = vmax.f32 %v2471, %v2289
        %v2480 = vmax.f32 %v2472, %v2305
        %v2481 = vmax.f32 %v2473, %v2321
        %v2482 = vmax.f32 %v2474, %v2337
        %v2483 = vmax.f32 %v2475, %v2353
        %v2484 = vmax.f32 %v2476, %v2369
        %v2485 = vmax.f32 %v2477, %v2385
        %v2486 = vmax.f32 %v2478, %v2401
        %v2487 = vmax.f32 %v2479, %v2290
        %v2488 = vmax.f32 %v2480, %v2306
        %v2489 = vmax.f32 %v2481, %v2322
        %v2490 = vmax.f32 %v2482, %v2338
        %v2491 = vmax.f32 %v2483, %v2354
        %v2492 = vmax.f32 %v2484, %v2370
        %v2493 = vmax.f32 %v2485, %v2386
        %v2494 = vmax.f32 %v2486, %v2402
        %v2495 = vmax.f32 %v2487, %v2291
        %v2496 = vmax.f32 %v2488, %v2307
        %v2497 = vmax.f32 %v2489, %v2323
        %v2498 = vmax.f32 %v2490, %v2339
        %v2499 = vmax.f32 %v2491, %v2355
        %v2500 = vmax.f32 %v2492, %v2371
        %v2501 = vmax.f32 %v2493, %v2387
        %v2502 = vmax.f32 %v2494, %v2403
        %v2503 = vmax.f32 %v2495, %v2292
        %v2504 = vmax.f32 %v2496, %v2308
        %v2505 = vmax.f32 %v2497, %v2324
        %v2506 = vmax.f32 %v2498, %v2340
        %v2507 = vmax.f32 %v2499, %v2356
        %v2508 = vmax.f32 %v2500, %v2372
        %v2509 = vmax.f32 %v2501, %v2388
        %v2510 = vmax.f32 %v2502, %v2404
        %v2511 = vmax.f32 %v2503, %v2293
        %v2512 = vmax.f32 %v2504, %v2309
        %v2513 = vmax.f32 %v2505, %v2325
        %v2514 = vmax.f32 %v2506, %v2341
        %v2515 = vmax.f32 %v2507, %v2357
        %v2516 = vmax.f32 %v2508, %v2373
        %v2517 = vmax.f32 %v2509, %v2389
        %v2518 = vmax.f32 %v2510, %v2405
        %v2519 = vmax.f32 %v2511, %v2294
        %v2520 = vmax.f32 %v2512, %v2310
        %v2521 = vmax.f32 %v2513, %v2326
        %v2522 = vmax.f32 %v2514, %v2342
        %v2523 = vmax.f32 %v2515, %v2358
        %v2524 = vmax.f32 %v2516, %v2374
        %v2525 = vmax.f32 %v2517, %v2390
        %v2526 = vmax.f32 %v2518, %v2406
        %2527 = vst [vmem:[%s320] sm:$0xff] %v2519
        %2528 = vst [vmem:[%s320 + $0x8] sm:$0xff] %v2520
        %2529 = vst [vmem:[%s320 + $0x10] sm:$0xff] %v2521
        %2530 = vst [vmem:[%s320 + $0x18] sm:$0xff] %v2522
        %2531 = vst [vmem:[%s320 + $0x20] sm:$0xff] %v2523
        %2532 = vst [vmem:[%s320 + $0x28] sm:$0xff] %v2524
        %2533 = vst [vmem:[%s320 + $0x30] sm:$0xff] %v2525
        %2534 = vst [vmem:[%s320 + $0x38] sm:$0xff] %v2526
        %s2535 = sand.u32 %s204, 1
        %s2536 = scalar_lea.sflag [#allocation3], %s2535
        %s2537 = sand.u32 %s204, 1
        %s2538 = smul.addr %s2537, 64
        %s2539 = scalar_lea.vmem [#allocation2], %s2538
        // Predicated region
        $region49: #{pointnet_sa_module_votes.1} parent=47 // pred_check
          %p2540 = pneg %p214
        $region50: #{pointnet_sa_module_votes.1} parent=47 // pred_check_branch
          %2542 = sbr.rel (%p2540) target = $region52
        $region51: #{pointnet_sa_module_votes.1} parent=47 // pred_region
          %s2544 = ssub.s32 1024, 1024
          %2545 = vsyncadd %s2536, %s2544
          %s2546 = smul.addr %s25, 8
          %s2547 = sadd.s32 %s26, %s2546
          %s2548 = smul.addr %s2547, 128
          %s2549 = scalar_lea.hbm %s7, %s2548
          %s2550 = sshll.u32 %s2539, 4
          %s2551 = int_to_ptr.vmem [resolvable:$true] %s2550
          %2556 = dma.vmem_to_hbm [thread:$0]  %s2551, 1024, %s2549, %s2536, 128, 128, 8
        $region52: #{pointnet_sa_module_votes.1} parent=47 // pred_fallthru
          _
      $region48: #{pointnet_sa_module_votes.1} parent=5 // pred_fallthru
        _
      %p2557 = scmp.le.s32.totalorder 2, %s16
      // Predicated region
      $region53: #{pointnet_sa_module_votes.1} parent=5 // pred_check
        %p2558 = pneg %p2557
      $region54: #{pointnet_sa_module_votes.1} parent=5 // pred_check_branch
        %2560 = sbr.rel (%p2558) target = $region56
      $region55: #{pointnet_sa_module_votes.1} parent=5 // pred_region
        %s2561 = ssub.s32 %s16, 2
        // Predicated region
        $region57: #{pointnet_sa_module_votes.1} parent=55 // pred_check
          %p2562 = pneg %p220
        $region58: #{pointnet_sa_module_votes.1} parent=55 // pred_check_branch
          %2564 = sbr.rel (%p2562) target = $region60
        $region59: #{pointnet_sa_module_votes.1} parent=55 // pred_region
          %s2565 = sand.u32 %s205, 1
          %s2566 = scalar_lea.sflag [#allocation3], %s2565
          %s2567 = sand.u32 %s205, 1
          %s2568 = smul.addr %s2567, 64
          %s2569 = scalar_lea.vmem [#allocation2], %s2568
          %2570 = dma.done %s2566, 1024
        $region60: #{pointnet_sa_module_votes.1} parent=55 // pred_fallthru
          _
      $region56: #{pointnet_sa_module_votes.1} parent=5 // pred_fallthru
        _
    $region6: #{pointnet_sa_module_votes.1} parent=1 // loop_footer
      %s20 = sadd.s32 1, %s16
    $region7: #{pointnet_sa_module_votes.1} parent=1 // loop_footer_branch
      %15 = sbr.rel target = $region3
    $region8: #{pointnet_sa_module_votes.1} parent=1 // loop_exit
      _
    %2571 = vsyncpa [#allocation3], 1
    %s2572 = scalar_lea.sflag [#allocation3], 1
    %2573 = vsyncpa %s2572, 1

</llo_original>
